<compile_context>
chip_gen: v6e
topology: v6e:2x2x1
jax: 0.10.0
libtpu: 0.0.40
codegen_flags: <defaults>
</compile_context>

<pallas_src>
import jax
import jax.numpy as jnp
from jax import lax
from jax.experimental import pallas as pl
from jax.experimental.pallas import tpu as pltpu

# Hyperparameters implied by the module's __init__ (kept SMALL).
d_model = 32
d_k = 8
d_v = 8
n_heads = 4
SEQ = 8
BATCH = 2
LN_EPS = 1e-5


def mha_kernel(q_ref, k_ref, v_ref, mask_ref,
               wqkv_ref, bqkv_ref, wo_ref, ogb_ref,
               out_ref, attn_ref):
    B, H, S = BATCH, n_heads, SEQ

    # Single grid step: everything is resident in VMEM.
    x_q = q_ref[...]                          # [B*S, d_model] (also the residual)
    x_k = k_ref[...]
    x_v = v_ref[...]

    w = wqkv_ref[...]                         # [d_model, 2*H*d_k + H*d_v]; wq pre-scaled 1/sqrt(d_k)
    b = bqkv_ref[...]                         # [1, 2*H*d_k + H*d_v];       bq pre-scaled 1/sqrt(d_k)
    dq = H * d_k
    dv = H * d_v

    # Three full-batch input projections.
    q_proj = jnp.dot(x_q, w[:, :dq], preferred_element_type=jnp.float32) + b[:, :dq]
    k_proj = jnp.dot(x_k, w[:, dq:2 * dq], preferred_element_type=jnp.float32) + b[:, dq:2 * dq]
    v_proj = jnp.dot(x_v, w[:, 2 * dq:2 * dq + dv],
                     preferred_element_type=jnp.float32) + b[:, 2 * dq:2 * dq + dv]

    def split_heads(x2, hd):
        # [B*S, H*hd] -> [B*H, S, hd] via static, tile-aligned slices + one stack.
        return jnp.stack(
            [x2[bi * S:(bi + 1) * S, h * hd:(h + 1) * hd]
             for bi in range(B) for h in range(H)],
            axis=0)

    qh = split_heads(q_proj, d_k)             # [B*H, S, d_k]
    kh = split_heads(k_proj, d_k)
    vh = split_heads(v_proj, d_v)

    # Scores for ALL (batch, head) pairs in one batched contraction over the last dims
    # (no transpose).  1/sqrt(d_k) is already folded into wq/bq.
    scores = lax.dot_general(qh, kh, (((2,), (2,)), ((0,), (0,))),
                             preferred_element_type=jnp.float32)     # [B*H, S, S]
    scores = scores.reshape(B, H, S, S)                              # leading-dim split only

    masked = mask_ref[...] > 0.5                                     # [B, S, S]
    scores = jnp.where(masked[:, None, :, :], jnp.float32(-1e9), scores)

    # Softmax(dim=-1) once for every batch/head (max-subtracted; mathematically identical).
    scores = scores - jnp.max(scores, axis=-1, keepdims=True)
    e = jnp.exp(scores)
    attn = e * pl.reciprocal(jnp.sum(e, axis=-1, keepdims=True), approx=True)  # EUP reciprocal

    attn_ref[...] = attn                                             # ONE dense [B,H,S,S] store

    # context = attn @ V for all batches/heads at once.
    ctx = lax.dot_general(attn.reshape(B * H, S, S), vh,
                          (((2,), (1,)), ((0,), (0,))),
                          preferred_element_type=jnp.float32)        # [B*H, S, d_v]

    # Output projection without concatenating heads on the lane dim:
    #   out[b] = sum_h ctx[b,h] @ wo[h*d_v:(h+1)*d_v, :]
    wo_h = wo_ref[...].reshape(H, d_v, d_model)                      # [H, d_v, d_model]
    wo_bh = jnp.broadcast_to(wo_h[None], (B, H, d_v, d_model)).reshape(B * H, d_v, d_model)
    per_head = lax.dot_general(ctx, wo_bh, (((2,), (1,)), ((0,), (0,))),
                               preferred_element_type=jnp.float32)   # [B*H, S, d_model]
    proj = jnp.sum(per_head.reshape(B, H, S, d_model), axis=1)       # [B, S, d_model]
    proj = proj.reshape(B * S, d_model)                              # leading-dim merge

    ogb = ogb_ref[...]                                               # [3, d_model]
    bo, gamma, beta = ogb[0:1], ogb[1:2], ogb[2:3]

    # Residual add + LayerNorm (biased variance, like torch), one dense store.
    out = proj + bo + x_q                                            # [B*S, d_model]
    mean = jnp.mean(out, axis=-1, keepdims=True)
    var = jnp.mean((out - mean) ** 2, axis=-1, keepdims=True)
    out_ref[...] = (out - mean) * lax.rsqrt(var + LN_EPS) * gamma + beta


def multi_head_attention(Q, K, V, attn_mask, params):
    """Q,K,V: [B,S,d_model] f32; attn_mask: [B,S,S] f32 (1.0 = masked)."""
    B, S, _ = Q.shape
    wq, bq, wk, bk, wv, bv, wo, bo, gamma, beta = params

    # Fold the 1/sqrt(d_k) score scale into the Q projection; pack parameters so the
    # kernel takes 4 parameter operands instead of 10 (fewer DMA descriptors).
    scale = 1.0 / jnp.sqrt(jnp.float32(d_k))
    w_qkv = jnp.concatenate([wq * scale, wk, wv], axis=1)      # [d_model, 2*H*d_k + H*d_v]
    b_qkv = jnp.concatenate([bq * scale, bk, bv], axis=1)      # [1, 2*H*d_k + H*d_v]
    ogb = jnp.concatenate([bo, gamma, beta], axis=0)           # [3, d_model]

    # Collapse batch into the sublane dimension: one grid step for everything.
    q2 = Q.reshape(B * S, d_model)
    k2 = K.reshape(B * S, d_model)
    v2 = V.reshape(B * S, d_model)

    def full(arr):
        nd = arr.ndim
        return pl.BlockSpec(arr.shape, lambda i, _nd=nd: (0,) * _nd)

    grid_spec = pltpu.PrefetchScalarGridSpec(
        num_scalar_prefetch=0,
        grid=(1,),
        in_specs=[
            full(q2), full(k2), full(v2), full(attn_mask),
            full(w_qkv), full(b_qkv), full(wo), full(ogb),
        ],
        out_specs=[
            pl.BlockSpec((B * S, d_model), lambda i: (0, 0)),
            pl.BlockSpec((B, n_heads, S, S), lambda i: (0, 0, 0, 0)),
        ],
    )

    out_shape = (
        jax.ShapeDtypeStruct((B * S, d_model), jnp.float32),
        jax.ShapeDtypeStruct((B, n_heads, S, S), jnp.float32),
    )

    out2, attn = pl.pallas_call(
        mha_kernel,
        grid_spec=grid_spec,
        out_shape=out_shape,
        compiler_params=pltpu.CompilerParams(
            dimension_semantics=("arbitrary",)),
    )(q2, k2, v2, attn_mask, w_qkv, b_qkv, wo, ogb)

    return out2.reshape(B, S, d_model), attn


def init_params(key):
    """Deterministic parameter init matching nn.Linear / nn.LayerNorm shapes.

    Weights are stored as [in, out] (i.e. torch weight transposed) so the
    kernel does x @ W + b directly.
    """
    ks = jax.random.split(key, 8)
    s = 0.1
    wq = s * jax.random.normal(ks[0], (d_model, n_heads * d_k), jnp.float32)
    bq = s * jax.random.normal(ks[1], (1, n_heads * d_k), jnp.float32)
    wk = s * jax.random.normal(ks[2], (d_model, n_heads * d_k), jnp.float32)
    bk = s * jax.random.normal(ks[3], (1, n_heads * d_k), jnp.float32)
    wv = s * jax.random.normal(ks[4], (d_model, n_heads * d_v), jnp.float32)
    bv = s * jax.random.normal(ks[5], (1, n_heads * d_v), jnp.float32)
    wo = s * jax.random.normal(ks[6], (n_heads * d_v, d_model), jnp.float32)
    bo = s * jax.random.normal(ks[7], (1, d_model), jnp.float32)
    gamma = jnp.ones((1, d_model), jnp.float32)
    beta = jnp.zeros((1, d_model), jnp.float32)
    return (wq, bq, wk, bk, wv, bv, wo, bo, gamma, beta)


def reference_mha(Q, K, V, attn_mask, params):
    """Pure-JAX reference mirroring the PyTorch forward exactly."""
    wq, bq, wk, bk, wv, bv, wo, bo, gamma, beta = params
    B, S, _ = Q.shape
    qp = (Q @ wq + bq).reshape(B, S, n_heads, d_k).transpose(0, 2, 1, 3)
    kp = (K @ wk + bk).reshape(B, S, n_heads, d_k).transpose(0, 2, 1, 3)
    vp = (V @ wv + bv).reshape(B, S, n_heads, d_v).transpose(0, 2, 1, 3)
    scores = jnp.einsum("bhqd,bhkd->bhqk", qp, kp) / jnp.sqrt(jnp.float32(d_k))
    mask4 = (attn_mask > 0.5)[:, None, :, :]
    scores = jnp.where(mask4, -1e9, scores)
    attn = jax.nn.softmax(scores, axis=-1)
    ctx = jnp.einsum("bhqk,bhkd->bhqd", attn, vp)
    ctx = ctx.transpose(0, 2, 1, 3).reshape(B, S, n_heads * d_v)
    out = ctx @ wo + bo + Q
    mean = out.mean(-1, keepdims=True)
    var = ((out - mean) ** 2).mean(-1, keepdims=True)
    out = (out - mean) / jnp.sqrt(var + LN_EPS) * gamma + beta
    return out, attn


if __name__ == "__main__":
    key = jax.random.PRNGKey(0)
    k_q, k_k, k_v, k_m, k_p = jax.random.split(key, 5)

    Q = jax.random.normal(k_q, (BATCH, SEQ, d_model), jnp.float32)
    K = jax.random.normal(k_k, (BATCH, SEQ, d_model), jnp.float32)
    V = jax.random.normal(k_v, (BATCH, SEQ, d_model), jnp.float32)
    # Random boolean mask (1.0 = masked), ~20% masked entries.
    attn_mask = (jax.random.uniform(k_m, (BATCH, SEQ, SEQ)) > 0.8).astype(jnp.float32)

    params = init_params(k_p)

    out, attn = multi_head_attention(Q, K, V, attn_mask, params)
    out, attn = jax.block_until_ready((out, attn))

    ref_out, ref_attn = reference_mha(Q, K, V, attn_mask, params)
    # Tolerances account for the approximate EUP reciprocal in the softmax denominator;
    # any real bug (head ordering, masking, LN) would produce O(0.1-1) mismatches.
    assert jnp.allclose(out, ref_out, atol=1e-2, rtol=1e-2), "output mismatch"
    assert jnp.allclose(attn, ref_attn, atol=1e-2, rtol=1e-2), "attn mismatch"

    print("KERNEL_OK")
</pallas_src>

<mosaic_0001>
module attributes {stable_mosaic.version = 11 : i64} {
  func.func @mha_kernel(%arg0: i32, %arg1: memref<16x32xf32, #tpu.memory_space<vmem>>, %arg2: memref<16x32xf32, #tpu.memory_space<vmem>>, %arg3: memref<16x32xf32, #tpu.memory_space<vmem>>, %arg4: memref<2x8x8xf32, #tpu.memory_space<vmem>>, %arg5: memref<32x96xf32, #tpu.memory_space<vmem>>, %arg6: memref<1x96xf32, #tpu.memory_space<vmem>>, %arg7: memref<32x32xf32, #tpu.memory_space<vmem>>, %arg8: memref<3x32xf32, #tpu.memory_space<vmem>>, %arg9: memref<16x32xf32, #tpu.memory_space<vmem>>, %arg10: memref<2x4x8x8xf32, #tpu.memory_space<vmem>>) attributes {dimension_semantics = [#tpu.dimension_semantics<arbitrary>], iteration_bounds = array<i64: 1>, scalar_prefetch = 0 : i64, scratch_operands = 0 : i64, tpu.core_type = #tpu.core_type<tc>, window_params = [{pipeline_mode = #tpu.pipeline_mode<synchronous>, transform_indices = @transform_0, window_bounds = array<i64: 16, 32>}, {pipeline_mode = #tpu.pipeline_mode<synchronous>, transform_indices = @transform_1, window_bounds = array<i64: 16, 32>}, {pipeline_mode = #tpu.pipeline_mode<synchronous>, transform_indices = @transform_2, window_bounds = array<i64: 16, 32>}, {pipeline_mode = #tpu.pipeline_mode<synchronous>, transform_indices = @transform_3, window_bounds = array<i64: 2, 8, 8>}, {pipeline_mode = #tpu.pipeline_mode<synchronous>, transform_indices = @transform_4, window_bounds = array<i64: 32, 96>}, {pipeline_mode = #tpu.pipeline_mode<synchronous>, transform_indices = @transform_5, window_bounds = array<i64: 1, 96>}, {pipeline_mode = #tpu.pipeline_mode<synchronous>, transform_indices = @transform_6, window_bounds = array<i64: 32, 32>}, {pipeline_mode = #tpu.pipeline_mode<synchronous>, transform_indices = @transform_7, window_bounds = array<i64: 3, 32>}, {pipeline_mode = #tpu.pipeline_mode<synchronous>, transform_indices = @transform_8, window_bounds = array<i64: 16, 32>}, {pipeline_mode = #tpu.pipeline_mode<synchronous>, transform_indices = @transform_9, window_bounds = array<i64: 2, 4, 8, 8>}]} {
    %c0 = arith.constant 0 : index
    %c0_0 = arith.constant 0 : index
    %0 = vector.load %arg1[%c0, %c0_0] : memref<16x32xf32, #tpu.memory_space<vmem>>, vector<16x32xf32>
    %c0_1 = arith.constant 0 : index
    %c0_2 = arith.constant 0 : index
    %1 = vector.load %arg2[%c0_1, %c0_2] : memref<16x32xf32, #tpu.memory_space<vmem>>, vector<16x32xf32>
    %c0_3 = arith.constant 0 : index
    %c0_4 = arith.constant 0 : index
    %2 = vector.load %arg3[%c0_3, %c0_4] : memref<16x32xf32, #tpu.memory_space<vmem>>, vector<16x32xf32>
    %c0_5 = arith.constant 0 : index
    %c0_6 = arith.constant 0 : index
    %3 = vector.load %arg5[%c0_5, %c0_6] : memref<32x96xf32, #tpu.memory_space<vmem>>, vector<32x96xf32>
    %c0_7 = arith.constant 0 : index
    %c0_8 = arith.constant 0 : index
    %4 = vector.load %arg6[%c0_7, %c0_8] : memref<1x96xf32, #tpu.memory_space<vmem>>, vector<1x96xf32>
    %5 = vector.extract_strided_slice %3 {offsets = [0, 0], sizes = [32, 32], strides = [1, 1]} : vector<32x96xf32> to vector<32x32xf32>
    %cst = arith.constant dense<0.000000e+00> : vector<16x32xf32>
    %6 = tpu.matmul %0, %5, %cst {dimension_numbers = #tpu.dot_dimension_numbers<[1], [0], [0], [1], [0, 0, 1, 1], [], []>} : vector<16x32xf32>, vector<32x32xf32>, vector<16x32xf32> -> vector<16x32xf32>
    %7 = vector.extract_strided_slice %4 {offsets = [0, 0], sizes = [1, 32], strides = [1, 1]} : vector<1x96xf32> to vector<1x32xf32>
    %8 = vector.broadcast %7 : vector<1x32xf32> to vector<16x32xf32>
    %9 = arith.addf %6, %8 : vector<16x32xf32>
    %10 = vector.extract_strided_slice %3 {offsets = [0, 32], sizes = [32, 32], strides = [1, 1]} : vector<32x96xf32> to vector<32x32xf32>
    %cst_9 = arith.constant dense<0.000000e+00> : vector<16x32xf32>
    %11 = tpu.matmul %1, %10, %cst_9 {dimension_numbers = #tpu.dot_dimension_numbers<[1], [0], [0], [1], [0, 0, 1, 1], [], []>} : vector<16x32xf32>, vector<32x32xf32>, vector<16x32xf32> -> vector<16x32xf32>
    %12 = vector.extract_strided_slice %4 {offsets = [0, 32], sizes = [1, 32], strides = [1, 1]} : vector<1x96xf32> to vector<1x32xf32>
    %13 = vector.broadcast %12 : vector<1x32xf32> to vector<16x32xf32>
    %14 = arith.addf %11, %13 : vector<16x32xf32>
    %15 = vector.extract_strided_slice %3 {offsets = [0, 64], sizes = [32, 32], strides = [1, 1]} : vector<32x96xf32> to vector<32x32xf32>
    %cst_10 = arith.constant dense<0.000000e+00> : vector<16x32xf32>
    %16 = tpu.matmul %2, %15, %cst_10 {dimension_numbers = #tpu.dot_dimension_numbers<[1], [0], [0], [1], [0, 0, 1, 1], [], []>} : vector<16x32xf32>, vector<32x32xf32>, vector<16x32xf32> -> vector<16x32xf32>
    %17 = vector.extract_strided_slice %4 {offsets = [0, 64], sizes = [1, 32], strides = [1, 1]} : vector<1x96xf32> to vector<1x32xf32>
    %18 = vector.broadcast %17 : vector<1x32xf32> to vector<16x32xf32>
    %19 = arith.addf %16, %18 : vector<16x32xf32>
    %20 = vector.extract_strided_slice %9 {offsets = [0, 0], sizes = [8, 8], strides = [1, 1]} : vector<16x32xf32> to vector<8x8xf32>
    %21 = vector.extract_strided_slice %9 {offsets = [0, 8], sizes = [8, 8], strides = [1, 1]} : vector<16x32xf32> to vector<8x8xf32>
    %22 = vector.extract_strided_slice %9 {offsets = [0, 16], sizes = [8, 8], strides = [1, 1]} : vector<16x32xf32> to vector<8x8xf32>
    %23 = vector.extract_strided_slice %9 {offsets = [0, 24], sizes = [8, 8], strides = [1, 1]} : vector<16x32xf32> to vector<8x8xf32>
    %24 = vector.extract_strided_slice %9 {offsets = [8, 0], sizes = [8, 8], strides = [1, 1]} : vector<16x32xf32> to vector<8x8xf32>
    %25 = vector.extract_strided_slice %9 {offsets = [8, 8], sizes = [8, 8], strides = [1, 1]} : vector<16x32xf32> to vector<8x8xf32>
    %26 = vector.extract_strided_slice %9 {offsets = [8, 16], sizes = [8, 8], strides = [1, 1]} : vector<16x32xf32> to vector<8x8xf32>
    %27 = vector.extract_strided_slice %9 {offsets = [8, 24], sizes = [8, 8], strides = [1, 1]} : vector<16x32xf32> to vector<8x8xf32>
    %28 = vector.shape_cast %20 : vector<8x8xf32> to vector<1x8x8xf32>
    %29 = vector.shape_cast %21 : vector<8x8xf32> to vector<1x8x8xf32>
    %30 = vector.shape_cast %22 : vector<8x8xf32> to vector<1x8x8xf32>
    %31 = vector.shape_cast %23 : vector<8x8xf32> to vector<1x8x8xf32>
    %32 = vector.shape_cast %24 : vector<8x8xf32> to vector<1x8x8xf32>
    %33 = vector.shape_cast %25 : vector<8x8xf32> to vector<1x8x8xf32>
    %34 = vector.shape_cast %26 : vector<8x8xf32> to vector<1x8x8xf32>
    %35 = vector.shape_cast %27 : vector<8x8xf32> to vector<1x8x8xf32>
    %36 = tpu.concatenate %28, %29, %30, %31, %32, %33, %34, %35 in 0 : vector<1x8x8xf32>, vector<1x8x8xf32>, vector<1x8x8xf32>, vector<1x8x8xf32>, vector<1x8x8xf32>, vector<1x8x8xf32>, vector<1x8x8xf32>, vector<1x8x8xf32> -> vector<8x8x8xf32>
    %37 = vector.extract_strided_slice %14 {offsets = [0, 0], sizes = [8, 8], strides = [1, 1]} : vector<16x32xf32> to vector<8x8xf32>
    %38 = vector.extract_strided_slice %14 {offsets = [0, 8], sizes = [8, 8], strides = [1, 1]} : vector<16x32xf32> to vector<8x8xf32>
    %39 = vector.extract_strided_slice %14 {offsets = [0, 16], sizes = [8, 8], strides = [1, 1]} : vector<16x32xf32> to vector<8x8xf32>
    %40 = vector.extract_strided_slice %14 {offsets = [0, 24], sizes = [8, 8], strides = [1, 1]} : vector<16x32xf32> to vector<8x8xf32>
    %41 = vector.extract_strided_slice %14 {offsets = [8, 0], sizes = [8, 8], strides = [1, 1]} : vector<16x32xf32> to vector<8x8xf32>
    %42 = vector.extract_strided_slice %14 {offsets = [8, 8], sizes = [8, 8], strides = [1, 1]} : vector<16x32xf32> to vector<8x8xf32>
    %43 = vector.extract_strided_slice %14 {offsets = [8, 16], sizes = [8, 8], strides = [1, 1]} : vector<16x32xf32> to vector<8x8xf32>
    %44 = vector.extract_strided_slice %14 {offsets = [8, 24], sizes = [8, 8], strides = [1, 1]} : vector<16x32xf32> to vector<8x8xf32>
    %45 = vector.shape_cast %37 : vector<8x8xf32> to vector<1x8x8xf32>
    %46 = vector.shape_cast %38 : vector<8x8xf32> to vector<1x8x8xf32>
    %47 = vector.shape_cast %39 : vector<8x8xf32> to vector<1x8x8xf32>
    %48 = vector.shape_cast %40 : vector<8x8xf32> to vector<1x8x8xf32>
    %49 = vector.shape_cast %41 : vector<8x8xf32> to vector<1x8x8xf32>
    %50 = vector.shape_cast %42 : vector<8x8xf32> to vector<1x8x8xf32>
    %51 = vector.shape_cast %43 : vector<8x8xf32> to vector<1x8x8xf32>
    %52 = vector.shape_cast %44 : vector<8x8xf32> to vector<1x8x8xf32>
    %53 = tpu.concatenate %45, %46, %47, %48, %49, %50, %51, %52 in 0 : vector<1x8x8xf32>, vector<1x8x8xf32>, vector<1x8x8xf32>, vector<1x8x8xf32>, vector<1x8x8xf32>, vector<1x8x8xf32>, vector<1x8x8xf32>, vector<1x8x8xf32> -> vector<8x8x8xf32>
    %54 = vector.extract_strided_slice %19 {offsets = [0, 0], sizes = [8, 8], strides = [1, 1]} : vector<16x32xf32> to vector<8x8xf32>
    %55 = vector.extract_strided_slice %19 {offsets = [0, 8], sizes = [8, 8], strides = [1, 1]} : vector<16x32xf32> to vector<8x8xf32>
    %56 = vector.extract_strided_slice %19 {offsets = [0, 16], sizes = [8, 8], strides = [1, 1]} : vector<16x32xf32> to vector<8x8xf32>
    %57 = vector.extract_strided_slice %19 {offsets = [0, 24], sizes = [8, 8], strides = [1, 1]} : vector<16x32xf32> to vector<8x8xf32>
    %58 = vector.extract_strided_slice %19 {offsets = [8, 0], sizes = [8, 8], strides = [1, 1]} : vector<16x32xf32> to vector<8x8xf32>
    %59 = vector.extract_strided_slice %19 {offsets = [8, 8], sizes = [8, 8], strides = [1, 1]} : vector<16x32xf32> to vector<8x8xf32>
    %60 = vector.extract_strided_slice %19 {offsets = [8, 16], sizes = [8, 8], strides = [1, 1]} : vector<16x32xf32> to vector<8x8xf32>
    %61 = vector.extract_strided_slice %19 {offsets = [8, 24], sizes = [8, 8], strides = [1, 1]} : vector<16x32xf32> to vector<8x8xf32>
    %62 = vector.shape_cast %54 : vector<8x8xf32> to vector<1x8x8xf32>
    %63 = vector.shape_cast %55 : vector<8x8xf32> to vector<1x8x8xf32>
    %64 = vector.shape_cast %56 : vector<8x8xf32> to vector<1x8x8xf32>
    %65 = vector.shape_cast %57 : vector<8x8xf32> to vector<1x8x8xf32>
    %66 = vector.shape_cast %58 : vector<8x8xf32> to vector<1x8x8xf32>
    %67 = vector.shape_cast %59 : vector<8x8xf32> to vector<1x8x8xf32>
    %68 = vector.shape_cast %60 : vector<8x8xf32> to vector<1x8x8xf32>
    %69 = vector.shape_cast %61 : vector<8x8xf32> to vector<1x8x8xf32>
    %70 = tpu.concatenate %62, %63, %64, %65, %66, %67, %68, %69 in 0 : vector<1x8x8xf32>, vector<1x8x8xf32>, vector<1x8x8xf32>, vector<1x8x8xf32>, vector<1x8x8xf32>, vector<1x8x8xf32>, vector<1x8x8xf32>, vector<1x8x8xf32> -> vector<8x8x8xf32>
    %cst_11 = arith.constant dense<0.000000e+00> : vector<8x8x8xf32>
    %71 = tpu.matmul %36, %53, %cst_11 {dimension_numbers = #tpu.dot_dimension_numbers<[2], [2], [1], [1], [0, 0, 0, 1, 1, 1], [0], [0]>} : vector<8x8x8xf32>, vector<8x8x8xf32>, vector<8x8x8xf32> -> vector<8x8x8xf32>
    %72 = vector.shape_cast %71 : vector<8x8x8xf32> to vector<2x4x8x8xf32>
    %c0_12 = arith.constant 0 : index
    %c0_13 = arith.constant 0 : index
    %c0_14 = arith.constant 0 : index
    %73 = vector.load %arg4[%c0_12, %c0_13, %c0_14] : memref<2x8x8xf32, #tpu.memory_space<vmem>>, vector<2x8x8xf32>
    %cst_15 = arith.constant 5.000000e-01 : f32
    %74 = vector.broadcast %cst_15 : f32 to vector<2x8x8xf32>
    %75 = arith.cmpf ogt, %73, %74 : vector<2x8x8xf32>
    %76 = vector.shape_cast %75 : vector<2x8x8xi1> to vector<2x1x8x8xi1>
    %cst_16 = arith.constant -1.000000e+09 : f32
    %77 = vector.shape_cast %76 : vector<2x1x8x8xi1> to vector<2x1x8x8xi1>
    %78 = vector.broadcast %77 : vector<2x1x8x8xi1> to vector<2x4x8x8xi1>
    %79 = vector.broadcast %cst_16 : f32 to vector<2x4x8x8xf32>
    %80 = arith.select %78, %79, %72 : vector<2x4x8x8xi1>, vector<2x4x8x8xf32>
    %cst_17 = arith.constant dense<0xFF800000> : vector<2x4x8xf32>
    %81 = vector.multi_reduction <maximumf>, %80, %cst_17 [3] : vector<2x4x8x8xf32> to vector<2x4x8xf32>
    %82 = vector.shape_cast %81 : vector<2x4x8xf32> to vector<2x4x8x1xf32>
    %83 = vector.broadcast %82 : vector<2x4x8x1xf32> to vector<2x4x8x8xf32>
    %84 = arith.subf %80, %83 : vector<2x4x8x8xf32>
    %85 = math.exp %84 : vector<2x4x8x8xf32>
    %cst_18 = arith.constant dense<0.000000e+00> : vector<2x4x8xf32>
    %86 = vector.multi_reduction <add>, %85, %cst_18 [3] : vector<2x4x8x8xf32> to vector<2x4x8xf32>
    %87 = vector.shape_cast %86 : vector<2x4x8xf32> to vector<2x4x8x1xf32>
    %88 = tpu.reciprocal %87 {approx = true} : vector<2x4x8x1xf32> -> vector<2x4x8x1xf32>
    %89 = vector.broadcast %88 : vector<2x4x8x1xf32> to vector<2x4x8x8xf32>
    %90 = arith.mulf %85, %89 : vector<2x4x8x8xf32>
    %c0_19 = arith.constant 0 : index
    %c0_20 = arith.constant 0 : index
    %c0_21 = arith.constant 0 : index
    %c0_22 = arith.constant 0 : index
    %91 = vector.load %arg10[%c0_19, %c0_20, %c0_21, %c0_22] : memref<2x4x8x8xf32, #tpu.memory_space<vmem>>, vector<2x4x8x8xf32>
    tpu.vector_store %arg10[%c0_19, %c0_20, %c0_21, %c0_22], %90 {strides = array<i32>} : memref<2x4x8x8xf32, #tpu.memory_space<vmem>>, vector<2x4x8x8xf32>,
    %92 = vector.shape_cast %90 : vector<2x4x8x8xf32> to vector<8x8x8xf32>
    %cst_23 = arith.constant dense<0.000000e+00> : vector<8x8x8xf32>
    %93 = tpu.matmul %92, %70, %cst_23 {dimension_numbers = #tpu.dot_dimension_numbers<[2], [1], [1], [2], [0, 0, 0, 1, 1, 2], [0], [0]>} : vector<8x8x8xf32>, vector<8x8x8xf32>, vector<8x8x8xf32> -> vector<8x8x8xf32>
    %c0_24 = arith.constant 0 : index
    %c0_25 = arith.constant 0 : index
    %94 = vector.load %arg7[%c0_24, %c0_25] : memref<32x32xf32, #tpu.memory_space<vmem>>, vector<32x32xf32>
    %95 = vector.shape_cast %94 : vector<32x32xf32> to vector<4x8x32xf32>
    %96 = vector.shape_cast %95 : vector<4x8x32xf32> to vector<1x4x8x32xf32>
    %97 = vector.shape_cast %96 : vector<1x4x8x32xf32> to vector<1x4x8x32xf32>
    %98 = vector.broadcast %97 : vector<1x4x8x32xf32> to vector<2x4x8x32xf32>
    %99 = vector.shape_cast %98 : vector<2x4x8x32xf32> to vector<8x8x32xf32>
    %cst_26 = arith.constant dense<0.000000e+00> : vector<8x8x32xf32>
    %100 = tpu.matmul %93, %99, %cst_26 {dimension_numbers = #tpu.dot_dimension_numbers<[2], [1], [1], [2], [0, 0, 0, 1, 1, 2], [0], [0]>} : vector<8x8x8xf32>, vector<8x8x32xf32>, vector<8x8x32xf32> -> vector<8x8x32xf32>
    %101 = vector.shape_cast %100 : vector<8x8x32xf32> to vector<2x4x8x32xf32>
    %cst_27 = arith.constant dense<0.000000e+00> : vector<2x8x32xf32>
    %102 = vector.multi_reduction <add>, %101, %cst_27 [1] : vector<2x4x8x32xf32> to vector<2x8x32xf32>
    %103 = vector.shape_cast %102 : vector<2x8x32xf32> to vector<16x32xf32>
    %c0_28 = arith.constant 0 : index
    %c0_29 = arith.constant 0 : index
    %104 = vector.load %arg8[%c0_28, %c0_29] : memref<3x32xf32, #tpu.memory_space<vmem>>, vector<3x32xf32>
    %105 = vector.extract_strided_slice %104 {offsets = [0, 0], sizes = [1, 32], strides = [1, 1]} : vector<3x32xf32> to vector<1x32xf32>
    %106 = vector.extract_strided_slice %104 {offsets = [1, 0], sizes = [1, 32], strides = [1, 1]} : vector<3x32xf32> to vector<1x32xf32>
    %107 = vector.extract_strided_slice %104 {offsets = [2, 0], sizes = [1, 32], strides = [1, 1]} : vector<3x32xf32> to vector<1x32xf32>
    %108 = vector.broadcast %105 : vector<1x32xf32> to vector<16x32xf32>
    %109 = arith.addf %103, %108 : vector<16x32xf32>
    %110 = arith.addf %109, %0 : vector<16x32xf32>
    %cst_30 = arith.constant dense<0.000000e+00> : vector<16xf32>
    %111 = vector.multi_reduction <add>, %110, %cst_30 [1] : vector<16x32xf32> to vector<16xf32>
    %112 = vector.shape_cast %111 : vector<16xf32> to vector<16x1xf32>
    %cst_31 = arith.constant 3.200000e+01 : f32
    %113 = vector.broadcast %cst_31 : f32 to vector<16x1xf32>
    %114 = arith.divf %112, %113 : vector<16x1xf32>
    %115 = vector.broadcast %114 : vector<16x1xf32> to vector<16x32xf32>
    %116 = arith.subf %110, %115 : vector<16x32xf32>
    %117 = arith.mulf %116, %116 : vector<16x32xf32>
    %cst_32 = arith.constant dense<0.000000e+00> : vector<16xf32>
    %118 = vector.multi_reduction <add>, %117, %cst_32 [1] : vector<16x32xf32> to vector<16xf32>
    %119 = vector.shape_cast %118 : vector<16xf32> to vector<16x1xf32>
    %cst_33 = arith.constant 3.200000e+01 : f32
    %120 = vector.broadcast %cst_33 : f32 to vector<16x1xf32>
    %121 = arith.divf %119, %120 : vector<16x1xf32>
    %122 = vector.broadcast %114 : vector<16x1xf32> to vector<16x32xf32>
    %123 = arith.subf %110, %122 : vector<16x32xf32>
    %cst_34 = arith.constant 9.99999974E-6 : f32
    %124 = vector.broadcast %cst_34 : f32 to vector<16x1xf32>
    %125 = arith.addf %121, %124 : vector<16x1xf32>
    %126 = math.rsqrt %125 : vector<16x1xf32>
    %127 = vector.broadcast %126 : vector<16x1xf32> to vector<16x32xf32>
    %128 = arith.mulf %123, %127 : vector<16x32xf32>
    %129 = vector.broadcast %106 : vector<1x32xf32> to vector<16x32xf32>
    %130 = arith.mulf %128, %129 : vector<16x32xf32>
    %131 = vector.broadcast %107 : vector<1x32xf32> to vector<16x32xf32>
    %132 = arith.addf %130, %131 : vector<16x32xf32>
    %c0_35 = arith.constant 0 : index
    %c0_36 = arith.constant 0 : index
    %133 = vector.load %arg9[%c0_35, %c0_36] : memref<16x32xf32, #tpu.memory_space<vmem>>, vector<16x32xf32>
    tpu.vector_store %arg9[%c0_35, %c0_36], %132 {strides = array<i32>} : memref<16x32xf32, #tpu.memory_space<vmem>>, vector<16x32xf32>,
    return
  }
  func.func @transform_0(%arg0: i32) -> (i32, i32) {
    %c0_i32 = arith.constant 0 : i32
    %c0_i32_0 = arith.constant 0 : i32
    %c0_i32_1 = arith.constant 0 : i32
    return %c0_i32, %c0_i32_0 : i32, i32
  }
  func.func @transform_1(%arg0: i32) -> (i32, i32) {
    %c0_i32 = arith.constant 0 : i32
    %c0_i32_0 = arith.constant 0 : i32
    %c0_i32_1 = arith.constant 0 : i32
    return %c0_i32, %c0_i32_0 : i32, i32
  }
  func.func @transform_2(%arg0: i32) -> (i32, i32) {
    %c0_i32 = arith.constant 0 : i32
    %c0_i32_0 = arith.constant 0 : i32
    %c0_i32_1 = arith.constant 0 : i32
    return %c0_i32, %c0_i32_0 : i32, i32
  }
  func.func @transform_3(%arg0: i32) -> (i32, i32, i32) {
    %c0_i32 = arith.constant 0 : i32
    %c0_i32_0 = arith.constant 0 : i32
    %c0_i32_1 = arith.constant 0 : i32
    %c0_i32_2 = arith.constant 0 : i32
    return %c0_i32, %c0_i32_0, %c0_i32_1 : i32, i32, i32
  }
  func.func @transform_4(%arg0: i32) -> (i32, i32) {
    %c0_i32 = arith.constant 0 : i32
    %c0_i32_0 = arith.constant 0 : i32
    %c0_i32_1 = arith.constant 0 : i32
    return %c0_i32, %c0_i32_0 : i32, i32
  }
  func.func @transform_5(%arg0: i32) -> (i32, i32) {
    %c0_i32 = arith.constant 0 : i32
    %c0_i32_0 = arith.constant 0 : i32
    %c0_i32_1 = arith.constant 0 : i32
    return %c0_i32, %c0_i32_0 : i32, i32
  }
  func.func @transform_6(%arg0: i32) -> (i32, i32) {
    %c0_i32 = arith.constant 0 : i32
    %c0_i32_0 = arith.constant 0 : i32
    %c0_i32_1 = arith.constant 0 : i32
    return %c0_i32, %c0_i32_0 : i32, i32
  }
  func.func @transform_7(%arg0: i32) -> (i32, i32) {
    %c0_i32 = arith.constant 0 : i32
    %c0_i32_0 = arith.constant 0 : i32
    %c0_i32_1 = arith.constant 0 : i32
    return %c0_i32, %c0_i32_0 : i32, i32
  }
  func.func @transform_8(%arg0: i32) -> (i32, i32) {
    %c0_i32 = arith.constant 0 : i32
    %c0_i32_0 = arith.constant 0 : i32
    %c0_i32_1 = arith.constant 0 : i32
    return %c0_i32, %c0_i32_0 : i32, i32
  }
  func.func @transform_9(%arg0: i32) -> (i32, i32, i32, i32) {
    %c0_i32 = arith.constant 0 : i32
    %c0_i32_0 = arith.constant 0 : i32
    %c0_i32_1 = arith.constant 0 : i32
    %c0_i32_2 = arith.constant 0 : i32
    %c0_i32_3 = arith.constant 0 : i32
    return %c0_i32, %c0_i32_0, %c0_i32_1, %c0_i32_2 : i32, i32, i32, i32
  }
}

</mosaic_0001>

<llo_original>
// kernel: tpu_custom_call.1
$region0: #{tpu_custom_call.1}
  #allocation0 [shape = 'u32[]', space=smem, size = 0x4, offset = 0x4, fixed_abs, tag = 'smem constant byte address 0x4 - core index']
  #allocation1 [shape = 'u32[144,128]{1,0:T(1,128)}', space=vmem, size = 0x12000, scoped, tag = 'internal scratch']
  %s0 = inlined_call_operand.hbm [shape: f32[16,32], index: 0, kind: input, shape index: {}]
  %s1 = inlined_call_operand.hbm [shape: f32[16,32], index: 1, kind: input, shape index: {}]
  %s2 = inlined_call_operand.hbm [shape: f32[16,32], index: 2, kind: input, shape index: {}]
  %s3 = inlined_call_operand.hbm [shape: f32[2,8,8], index: 3, kind: input, shape index: {}]
  %s4 = inlined_call_operand.hbm [shape: f32[32,96], index: 4, kind: input, shape index: {}]
  %s5 = inlined_call_operand.vmem [shape: f32[1,96], index: 5, kind: input, shape index: {}]
  %s6 = inlined_call_operand.hbm [shape: f32[32,32], index: 6, kind: input, shape index: {}]
  %s7 = inlined_call_operand.vmem [shape: f32[3,32], index: 7, kind: input, shape index: {}]
  %s8 = inlined_call_operand.hbm [shape: f32[16,32], index: 8, kind: output, shape index: {0}]
  %s9 = inlined_call_operand.hbm [shape: f32[2,4,8,8], index: 9, kind: output, shape index: {1}]
  %10 = xla_tuple %s8, %s9
  %s11 = sld [smem:[#allocation0]]
  $region74: #{tpu_custom_call.1} parent=0
    _
  %s13 = ssub.s32 1, %s11
  %s14 = scalar_select 0, %s13, %s11
  $region1: #{tpu_custom_call.1} parent=0
    #allocation2 [shape = 'u8[8192]{0}', space=vmem, size = 0x2000, scoped, tag = 'input window, operand 0, single buffered']
    #allocation3 [shape = 's32[1]{0}', space=sflag, size = 0x4, scoped, tag = 'scoped memory for tpu_custom_call.1']
    #allocation4 [shape = 's32[1]{0}', space=sflag, size = 0x4, scoped, tag = 'scoped memory for tpu_custom_call.1']
    #allocation5 [shape = 'u8[8192]{0}', space=vmem, size = 0x2000, scoped, tag = 'input window, operand 1, single buffered']
    #allocation6 [shape = 's32[1]{0}', space=sflag, size = 0x4, scoped, tag = 'scoped memory for tpu_custom_call.1']
    #allocation7 [shape = 'u8[8192]{0}', space=vmem, size = 0x2000, scoped, tag = 'input window, operand 2, single buffered']
    #allocation8 [shape = 'u8[8192]{0}', space=vmem, size = 0x2000, scoped, tag = 'input window, operand 3, single buffered']
    #allocation9 [shape = 's32[1]{0}', space=sflag, size = 0x4, scoped, tag = 'scoped memory for tpu_custom_call.1']
    #allocation10 [shape = 'u8[16384]{0}', space=vmem, size = 0x4000, scoped, tag = 'input window, operand 4, single buffered']
    #allocation11 [shape = 'u8[16384]{0}', space=vmem, size = 0x4000, scoped, tag = 'input window, operand 6, single buffered']
    #allocation12 [shape = 's32[1]{0}', space=sflag, size = 0x4, scoped, tag = 'scoped memory for tpu_custom_call.1']
    #allocation13 [shape = 'u8[8192]{0}', space=vmem, size = 0x2000, scoped, tag = 'output window, operand 0, single buffered']
    #allocation14 [shape = 'u8[32768]{0}', space=vmem, size = 0x8000, scoped, tag = 'output window, operand 1, single buffered']
    #allocation15 [shape = 's32[1]{0}', space=sflag, size = 0x4, scoped, tag = 'scoped memory for tpu_custom_call.1']
    %15 = vsyncpa [#allocation3], 0
    %16 = vsyncpa [#allocation6], 0
    %17 = vsyncpa [#allocation9], 0
    %18 = vsyncpa [#allocation12], 0
    %19 = vsyncpa [#allocation4], 0
    %20 = vsyncpa [#allocation15], 0
    // Predicated region
    $region2: #{tpu_custom_call.1} parent=1 // pred_check
      _
    $region3: #{tpu_custom_call.1} parent=1 // pred_check_branch
      %22 = sbr.rel (0) target = $region5
    $region4: #{tpu_custom_call.1} parent=1 // pred_region
      %s24 = ssub.s32 256, 256
      %25 = vsyncadd [#allocation3], %s24
      %s26 = sshll.u32 [#allocation2], 4
      %s27 = int_to_ptr.vmem [resolvable:$true] %s26
      %32 = dma.hbm_to_vmem [thread:$0]  %s0, 256, %s27, [#allocation3], 128, 128, 8
    $region5: #{tpu_custom_call.1} parent=1 // pred_fallthru
      _
    // Predicated region
    $region6: #{tpu_custom_call.1} parent=1 // pred_check
      _
    $region7: #{tpu_custom_call.1} parent=1 // pred_check_branch
      %34 = sbr.rel (0) target = $region9
    $region8: #{tpu_custom_call.1} parent=1 // pred_region
      %s36 = ssub.s32 256, 256
      %37 = vsyncadd [#allocation6], %s36
      %s38 = sshll.u32 [#allocation5], 4
      %s39 = int_to_ptr.vmem [resolvable:$true] %s38
      %44 = dma.hbm_to_vmem [thread:$0]  %s1, 256, %s39, [#allocation6], 128, 128, 8
    $region9: #{tpu_custom_call.1} parent=1 // pred_fallthru
      _
    // Predicated region
    $region10: #{tpu_custom_call.1} parent=1 // pred_check
      _
    $region11: #{tpu_custom_call.1} parent=1 // pred_check_branch
      %46 = sbr.rel (0) target = $region13
    $region12: #{tpu_custom_call.1} parent=1 // pred_region
      %s48 = ssub.s32 256, 256
      %49 = vsyncadd [#allocation6], %s48
      %s50 = sshll.u32 [#allocation7], 4
      %s51 = int_to_ptr.vmem [resolvable:$true] %s50
      %56 = dma.hbm_to_vmem [thread:$0]  %s2, 256, %s51, [#allocation6], 128, 128, 8
    $region13: #{tpu_custom_call.1} parent=1 // pred_fallthru
      _
    // Predicated region
    $region14: #{tpu_custom_call.1} parent=1 // pred_check
      _
    $region15: #{tpu_custom_call.1} parent=1 // pred_check_branch
      %58 = sbr.rel (0) target = $region17
    $region16: #{tpu_custom_call.1} parent=1 // pred_region
      %s60 = ssub.s32 256, 256
      %61 = vsyncadd [#allocation9], %s60
      %s62 = sshll.u32 [#allocation8], 4
      %s63 = int_to_ptr.vmem [resolvable:$true] %s62
      %68 = dma.hbm_to_vmem [thread:$0]  %s3, 256, %s63, [#allocation9], 128, 128, 8
    $region17: #{tpu_custom_call.1} parent=1 // pred_fallthru
      _
    // Predicated region
    $region18: #{tpu_custom_call.1} parent=1 // pred_check
      _
    $region19: #{tpu_custom_call.1} parent=1 // pred_check_branch
      %70 = sbr.rel (0) target = $region21
    $region20: #{tpu_custom_call.1} parent=1 // pred_region
      %s72 = ssub.s32 512, 512
      %73 = vsyncadd [#allocation9], %s72
      %s74 = sshll.u32 [#allocation10], 4
      %s75 = int_to_ptr.vmem [resolvable:$true] %s74
      %80 = dma.hbm_to_vmem [thread:$0]  %s4, 512, %s75, [#allocation9], 128, 128, 8
    $region21: #{tpu_custom_call.1} parent=1 // pred_fallthru
      _
    // Predicated region
    $region22: #{tpu_custom_call.1} parent=1 // pred_check
      _
    $region23: #{tpu_custom_call.1} parent=1 // pred_check_branch
      %82 = sbr.rel (0) target = $region25
    $region24: #{tpu_custom_call.1} parent=1 // pred_region
      _
    $region25: #{tpu_custom_call.1} parent=1 // pred_fallthru
      _
    // Predicated region
    $region26: #{tpu_custom_call.1} parent=1 // pred_check
      _
    $region27: #{tpu_custom_call.1} parent=1 // pred_check_branch
      %84 = sbr.rel (0) target = $region29
    $region28: #{tpu_custom_call.1} parent=1 // pred_region
      %s86 = ssub.s32 512, 512
      %87 = vsyncadd [#allocation12], %s86
      %s88 = sshll.u32 [#allocation11], 4
      %s89 = int_to_ptr.vmem [resolvable:$true] %s88
      %94 = dma.hbm_to_vmem [thread:$0]  %s6, 512, %s89, [#allocation12], 128, 128, 8
    $region29: #{tpu_custom_call.1} parent=1 // pred_fallthru
      _
    // Predicated region
    $region30: #{tpu_custom_call.1} parent=1 // pred_check
      _
    $region31: #{tpu_custom_call.1} parent=1 // pred_check_branch
      %96 = sbr.rel (0) target = $region33
    $region32: #{tpu_custom_call.1} parent=1 // pred_region
      _
    $region33: #{tpu_custom_call.1} parent=1 // pred_fallthru
      _
    // Predicated region
    $region34: #{tpu_custom_call.1} parent=1 // pred_check
      _
    $region35: #{tpu_custom_call.1} parent=1 // pred_check_branch
      %98 = sbr.rel (0) target = $region37
    $region36: #{tpu_custom_call.1} parent=1 // pred_region
      %99 = dma.done [#allocation3], 256
    $region37: #{tpu_custom_call.1} parent=1 // pred_fallthru
      _
    // Predicated region
    $region38: #{tpu_custom_call.1} parent=1 // pred_check
      _
    $region39: #{tpu_custom_call.1} parent=1 // pred_check_branch
      %101 = sbr.rel (0) target = $region41
    $region40: #{tpu_custom_call.1} parent=1 // pred_region
      %102 = dma.done [#allocation6], 256
    $region41: #{tpu_custom_call.1} parent=1 // pred_fallthru
      _
    // Predicated region
    $region42: #{tpu_custom_call.1} parent=1 // pred_check
      _
    $region43: #{tpu_custom_call.1} parent=1 // pred_check_branch
      %104 = sbr.rel (0) target = $region45
    $region44: #{tpu_custom_call.1} parent=1 // pred_region
      %105 = dma.done [#allocation6], 256
    $region45: #{tpu_custom_call.1} parent=1 // pred_fallthru
      _
    // Predicated region
    $region46: #{tpu_custom_call.1} parent=1 // pred_check
      _
    $region47: #{tpu_custom_call.1} parent=1 // pred_check_branch
      %107 = sbr.rel (0) target = $region49
    $region48: #{tpu_custom_call.1} parent=1 // pred_region
      %108 = dma.done [#allocation9], 256
    $region49: #{tpu_custom_call.1} parent=1 // pred_fallthru
      _
    // Predicated region
    $region50: #{tpu_custom_call.1} parent=1 // pred_check
      _
    $region51: #{tpu_custom_call.1} parent=1 // pred_check_branch
      %110 = sbr.rel (0) target = $region53
    $region52: #{tpu_custom_call.1} parent=1 // pred_region
      %111 = dma.done [#allocation9], 512
    $region53: #{tpu_custom_call.1} parent=1 // pred_fallthru
      _
    // Predicated region
    $region54: #{tpu_custom_call.1} parent=1 // pred_check
      _
    $region55: #{tpu_custom_call.1} parent=1 // pred_check_branch
      %113 = sbr.rel (0) target = $region57
    $region56: #{tpu_custom_call.1} parent=1 // pred_region
      %114 = dma.done [#allocation12], 512
    $region57: #{tpu_custom_call.1} parent=1 // pred_fallthru
      _
    %v115 = vld [vmem:[#allocation2] sm:$0xff]
    %v116 = vld [vmem:[#allocation2 + $0x8] sm:$0xff]
    %v117 = vld [vmem:[#allocation5] sm:$0xff]
    %v118 = vld [vmem:[#allocation5 + $0x8] sm:$0xff]
    %v119 = vld [vmem:[#allocation7] sm:$0xff]
    %v120 = vld [vmem:[#allocation7 + $0x8] sm:$0xff]
    %v121 = vld [vmem:[#allocation10] sm:$0xff]
    %v122 = vld [vmem:[#allocation10 + $0x8] sm:$0xff]
    %v123 = vld [vmem:[#allocation10 + $0x10] sm:$0xff]
    %v124 = vld [vmem:[#allocation10 + $0x18] sm:$0xff]
    %v125 = vld [vmem:[%s5] sm:$0x1]
    %v127 = vlaneseq
    %v128 = vshrl.u32 %v127, 7
    %v129 = vsub.s32 0, %v128
    %v130 = vrot.slane %v125, %v129
    %vm132 = vcmask 261120
    %v134 = vsel %vm132, %v115, 0
    %v137 = vsel %vm132, %v116, 0
    %139 = vmatprep.subr.mxu0 0.0
    %140 = vmatpush1.msra.mxu0 0.0
    %141 = vmatprep.subr.mxu0 0.0
    %142 = vmatpush1.msra.mxu0 0.0
    %143 = vmatprep.subr.mxu0 0.0
    %144 = vmatpush1.msra.mxu0 0.0
    %145 = vmatprep.subr.mxu0 0.0
    %146 = vmatpush1.msra.mxu0 0.0
    %147 = vmatprep.subr.mxu0 0.0
    %148 = vmatpush1.msra.mxu0 0.0
    %149 = vmatprep.subr.mxu0 0.0
    %150 = vmatpush1.msra.mxu0 0.0
    %151 = vmatprep.subr.mxu0 0.0
    %152 = vmatpush1.msra.mxu0 0.0
    %153 = vmatprep.subr.mxu0 0.0
    %154 = vmatpush1.msra.mxu0 0.0
    %155 = vmatprep.subr.mxu0 0.0
    %156 = vmatpush1.msra.mxu0 0.0
    %157 = vmatprep.subr.mxu0 0.0
    %158 = vmatpush1.msra.mxu0 0.0
    %159 = vmatprep.subr.mxu0 0.0
    %160 = vmatpush1.msra.mxu0 0.0
    %161 = vmatprep.subr.mxu0 0.0
    %162 = vmatpush1.msra.mxu0 0.0
    %163 = vmatprep.subr.mxu0 0.0
    %164 = vmatpush1.msra.mxu0 %v124
    %165 = vmatprep.subr.mxu0 0.0
    %166 = vmatpush1.msra.mxu0 %v123
    %167 = vmatprep.subr.mxu0 0.0
    %168 = vmatpush1.msra.mxu0 %v122
    %169 = vmatprep.subr.mxu0 0.0
    %170 = vmatpush1.msra.mxu0 %v121
    %171 = vmatprep.subr.mxu0 0.0
    %172 = vmatpush2.msra.mxu0 0.0
    %173 = vmatprep.subr.mxu0 0.0
    %174 = vmatpush2.msra.mxu0 0.0
    %175 = vmatprep.subr.mxu0 0.0
    %176 = vmatpush2.msra.mxu0 0.0
    %177 = vmatprep.subr.mxu0 0.0
    %178 = vmatpush2.msra.mxu0 0.0
    %179 = vmatprep.subr.mxu0 0.0
    %180 = vmatpush2.msra.mxu0 0.0
    %181 = vmatprep.subr.mxu0 0.0
    %182 = vmatpush2.msra.mxu0 0.0
    %183 = vmatprep.subr.mxu0 0.0
    %184 = vmatpush2.msra.mxu0 0.0
    %185 = vmatprep.subr.mxu0 0.0
    %186 = vmatpush2.msra.mxu0 0.0
    %187 = vmatprep.subr.mxu0 0.0
    %188 = vmatpush2.msra.mxu0 0.0
    %189 = vmatprep.subr.mxu0 0.0
    %190 = vmatpush2.msra.mxu0 0.0
    %191 = vmatprep.subr.mxu0 0.0
    %192 = vmatpush2.msra.mxu0 0.0
    %193 = vmatprep.subr.mxu0 0.0
    %194 = vmatpush2.msra.mxu0 0.0
    %195 = vmatprep.subr.mxu0 0.0
    %196 = vmatpush2.msra.mxu0 0.0
    %197 = vmatprep.subr.mxu0 0.0
    %198 = vmatpush2.msra.mxu0 0.0
    %199 = vmatprep.subr.mxu0 0.0
    %200 = vmatpush2.msra.mxu0 0.0
    %201 = vmatprep.subr.mxu0 0.0
    %202 = vmatpush2.msra.mxu0 0.0
    %203 = vmatprep.mubr.f32.mxu0 0.0
    %204 = vmatmul.mubr.f32.gmra.mxu0 %v134
    %v205 = vpop.f32.mrf.mxu0
    %v206 = vadd.f32 %v130, %v205
    %v207 = vpop.f32.mrf.mxu0
    %208 = vmatprep.mubr.f32.mxu0 0.0
    %209 = vmatmul.mubr.f32.gmra.mxu0 %v137
    %v210 = vpop.f32.mrf.mxu0
    %v211 = vadd.f32 %v130, %v210
    %v212 = vpop.f32.mrf.mxu0
    %213 = vdwg.mxu0
    %218 = vrot.lane.b32.xlu0 %v121, 96
    %v219 = vpop.permute.xlu0 %218
    %220 = vrot.lane.b32.xlu0 %v122, 96
    %v221 = vpop.permute.xlu0 %220
    %222 = vrot.lane.b32.xlu0 %v123, 96
    %v223 = vpop.permute.xlu0 %222
    %224 = vrot.lane.b32.xlu0 %v124, 96
    %v225 = vpop.permute.xlu0 %224
    %230 = vrot.lane.b32.xlu0 %v130, 96
    %v231 = vpop.permute.xlu0 %230
    %v234 = vsel %vm132, %v117, 0
    %v237 = vsel %vm132, %v118, 0
    %239 = vmatprep.subr.mxu0 0.0
    %240 = vmatpush1.msra.mxu0 0.0
    %241 = vmatprep.subr.mxu0 0.0
    %242 = vmatpush1.msra.mxu0 0.0
    %243 = vmatprep.subr.mxu0 0.0
    %244 = vmatpush1.msra.mxu0 0.0
    %245 = vmatprep.subr.mxu0 0.0
    %246 = vmatpush1.msra.mxu0 0.0
    %247 = vmatprep.subr.mxu0 0.0
    %248 = vmatpush1.msra.mxu0 0.0
    %249 = vmatprep.subr.mxu0 0.0
    %250 = vmatpush1.msra.mxu0 0.0
    %251 = vmatprep.subr.mxu0 0.0
    %252 = vmatpush1.msra.mxu0 0.0
    %253 = vmatprep.subr.mxu0 0.0
    %254 = vmatpush1.msra.mxu0 0.0
    %255 = vmatprep.subr.mxu0 0.0
    %256 = vmatpush1.msra.mxu0 0.0
    %257 = vmatprep.subr.mxu0 0.0
    %258 = vmatpush1.msra.mxu0 0.0
    %259 = vmatprep.subr.mxu0 0.0
    %260 = vmatpush1.msra.mxu0 0.0
    %261 = vmatprep.subr.mxu0 0.0
    %262 = vmatpush1.msra.mxu0 0.0
    %263 = vmatprep.subr.mxu0 0.0
    %264 = vmatpush1.msra.mxu0 %v225
    %265 = vmatprep.subr.mxu0 0.0
    %266 = vmatpush1.msra.mxu0 %v223
    %267 = vmatprep.subr.mxu0 0.0
    %268 = vmatpush1.msra.mxu0 %v221
    %269 = vmatprep.subr.mxu0 0.0
    %270 = vmatpush1.msra.mxu0 %v219
    %271 = vmatprep.subr.mxu0 0.0
    %272 = vmatpush2.msra.mxu0 0.0
    %273 = vmatprep.subr.mxu0 0.0
    %274 = vmatpush2.msra.mxu0 0.0
    %275 = vmatprep.subr.mxu0 0.0
    %276 = vmatpush2.msra.mxu0 0.0
    %277 = vmatprep.subr.mxu0 0.0
    %278 = vmatpush2.msra.mxu0 0.0
    %279 = vmatprep.subr.mxu0 0.0
    %280 = vmatpush2.msra.mxu0 0.0
    %281 = vmatprep.subr.mxu0 0.0
    %282 = vmatpush2.msra.mxu0 0.0
    %283 = vmatprep.subr.mxu0 0.0
    %284 = vmatpush2.msra.mxu0 0.0
    %285 = vmatprep.subr.mxu0 0.0
    %286 = vmatpush2.msra.mxu0 0.0
    %287 = vmatprep.subr.mxu0 0.0
    %288 = vmatpush2.msra.mxu0 0.0
    %289 = vmatprep.subr.mxu0 0.0
    %290 = vmatpush2.msra.mxu0 0.0
    %291 = vmatprep.subr.mxu0 0.0
    %292 = vmatpush2.msra.mxu0 0.0
    %293 = vmatprep.subr.mxu0 0.0
    %294 = vmatpush2.msra.mxu0 0.0
    %295 = vmatprep.subr.mxu0 0.0
    %296 = vmatpush2.msra.mxu0 0.0
    %297 = vmatprep.subr.mxu0 0.0
    %298 = vmatpush2.msra.mxu0 0.0
    %299 = vmatprep.subr.mxu0 0.0
    %300 = vmatpush2.msra.mxu0 0.0
    %301 = vmatprep.subr.mxu0 0.0
    %302 = vmatpush2.msra.mxu0 0.0
    %303 = vmatprep.mubr.f32.mxu0 0.0
    %304 = vmatmul.mubr.f32.gmra.mxu0 %v234
    %v305 = vpop.f32.mrf.mxu0
    %v306 = vadd.f32 %v231, %v305
    %v307 = vpop.f32.mrf.mxu0
    %308 = vmatprep.mubr.f32.mxu0 0.0
    %309 = vmatmul.mubr.f32.gmra.mxu0 %v237
    %v310 = vpop.f32.mrf.mxu0
    %v311 = vadd.f32 %v231, %v310
    %v312 = vpop.f32.mrf.mxu0
    %313 = vdwg.mxu0
    %314 = vrot.lane.b32.xlu0 %v121, 64
    %v315 = vpop.permute.xlu0 %314
    %316 = vrot.lane.b32.xlu0 %v122, 64
    %v317 = vpop.permute.xlu0 %316
    %318 = vrot.lane.b32.xlu0 %v123, 64
    %v319 = vpop.permute.xlu0 %318
    %320 = vrot.lane.b32.xlu0 %v124, 64
    %v321 = vpop.permute.xlu0 %320
    %326 = vrot.lane.b32.xlu0 %v130, 64
    %v327 = vpop.permute.xlu0 %326
    %v330 = vsel %vm132, %v119, 0
    %v333 = vsel %vm132, %v120, 0
    %335 = vmatprep.subr.mxu0 0.0
    %336 = vmatpush1.msra.mxu0 0.0
    %337 = vmatprep.subr.mxu0 0.0
    %338 = vmatpush1.msra.mxu0 0.0
    %339 = vmatprep.subr.mxu0 0.0
    %340 = vmatpush1.msra.mxu0 0.0
    %341 = vmatprep.subr.mxu0 0.0
    %342 = vmatpush1.msra.mxu0 0.0
    %343 = vmatprep.subr.mxu0 0.0
    %344 = vmatpush1.msra.mxu0 0.0
    %345 = vmatprep.subr.mxu0 0.0
    %346 = vmatpush1.msra.mxu0 0.0
    %347 = vmatprep.subr.mxu0 0.0
    %348 = vmatpush1.msra.mxu0 0.0
    %349 = vmatprep.subr.mxu0 0.0
    %350 = vmatpush1.msra.mxu0 0.0
    %351 = vmatprep.subr.mxu0 0.0
    %352 = vmatpush1.msra.mxu0 0.0
    %353 = vmatprep.subr.mxu0 0.0
    %354 = vmatpush1.msra.mxu0 0.0
    %355 = vmatprep.subr.mxu0 0.0
    %356 = vmatpush1.msra.mxu0 0.0
    %357 = vmatprep.subr.mxu0 0.0
    %358 = vmatpush1.msra.mxu0 0.0
    %359 = vmatprep.subr.mxu0 0.0
    %360 = vmatpush1.msra.mxu0 %v321
    %361 = vmatprep.subr.mxu0 0.0
    %362 = vmatpush1.msra.mxu0 %v319
    %363 = vmatprep.subr.mxu0 0.0
    %364 = vmatpush1.msra.mxu0 %v317
    %365 = vmatprep.subr.mxu0 0.0
    %366 = vmatpush1.msra.mxu0 %v315
    %367 = vmatprep.subr.mxu0 0.0
    %368 = vmatpush2.msra.mxu0 0.0
    %369 = vmatprep.subr.mxu0 0.0
    %370 = vmatpush2.msra.mxu0 0.0
    %371 = vmatprep.subr.mxu0 0.0
    %372 = vmatpush2.msra.mxu0 0.0
    %373 = vmatprep.subr.mxu0 0.0
    %374 = vmatpush2.msra.mxu0 0.0
    %375 = vmatprep.subr.mxu0 0.0
    %376 = vmatpush2.msra.mxu0 0.0
    %377 = vmatprep.subr.mxu0 0.0
    %378 = vmatpush2.msra.mxu0 0.0
    %379 = vmatprep.subr.mxu0 0.0
    %380 = vmatpush2.msra.mxu0 0.0
    %381 = vmatprep.subr.mxu0 0.0
    %382 = vmatpush2.msra.mxu0 0.0
    %383 = vmatprep.subr.mxu0 0.0
    %384 = vmatpush2.msra.mxu0 0.0
    %385 = vmatprep.subr.mxu0 0.0
    %386 = vmatpush2.msra.mxu0 0.0
    %387 = vmatprep.subr.mxu0 0.0
    %388 = vmatpush2.msra.mxu0 0.0
    %389 = vmatprep.subr.mxu0 0.0
    %390 = vmatpush2.msra.mxu0 0.0
    %391 = vmatprep.subr.mxu0 0.0
    %392 = vmatpush2.msra.mxu0 0.0
    %393 = vmatprep.subr.mxu0 0.0
    %394 = vmatpush2.msra.mxu0 0.0
    %395 = vmatprep.subr.mxu0 0.0
    %396 = vmatpush2.msra.mxu0 0.0
    %397 = vmatprep.subr.mxu0 0.0
    %398 = vmatpush2.msra.mxu0 0.0
    %399 = vmatprep.mubr.f32.mxu0 0.0
    %400 = vmatmul.mubr.f32.gmra.mxu0 %v330
    %v401 = vpop.f32.mrf.mxu0
    %v402 = vadd.f32 %v327, %v401
    %v403 = vpop.f32.mrf.mxu0
    %404 = vmatprep.mubr.f32.mxu0 0.0
    %405 = vmatmul.mubr.f32.gmra.mxu0 %v333
    %v406 = vpop.f32.mrf.mxu0
    %v407 = vadd.f32 %v327, %v406
    %v408 = vpop.f32.mrf.mxu0
    %409 = vdwg.mxu0
    %411 = vrot.lane.b32.xlu0 %v206, 120
    %v412 = vpop.permute.xlu0 %411
    %413 = vrot.lane.b32.xlu0 %v206, 112
    %v414 = vpop.permute.xlu0 %413
    %415 = vrot.lane.b32.xlu0 %v206, 104
    %v416 = vpop.permute.xlu0 %415
    %418 = vrot.lane.b32.xlu0 %v211, 120
    %v419 = vpop.permute.xlu0 %418
    %420 = vrot.lane.b32.xlu0 %v211, 112
    %v421 = vpop.permute.xlu0 %420
    %422 = vrot.lane.b32.xlu0 %v211, 104
    %v423 = vpop.permute.xlu0 %422
    %425 = vrot.lane.b32.xlu0 %v306, 120
    %v426 = vpop.permute.xlu0 %425
    %427 = vrot.lane.b32.xlu0 %v306, 112
    %v428 = vpop.permute.xlu0 %427
    %429 = vrot.lane.b32.xlu0 %v306, 104
    %v430 = vpop.permute.xlu0 %429
    %432 = vrot.lane.b32.xlu0 %v311, 120
    %v433 = vpop.permute.xlu0 %432
    %434 = vrot.lane.b32.xlu0 %v311, 112
    %v435 = vpop.permute.xlu0 %434
    %436 = vrot.lane.b32.xlu0 %v311, 104
    %v437 = vpop.permute.xlu0 %436
    %439 = vrot.lane.b32.xlu0 %v402, 120
    %v440 = vpop.permute.xlu0 %439
    %442 = vrot.lane.b32.xlu0 %v402, 112
    %v443 = vpop.permute.xlu0 %442
    %445 = vrot.lane.b32.xlu0 %v402, 104
    %v446 = vpop.permute.xlu0 %445
    %449 = vrot.lane.b32.xlu0 %v407, 120
    %v450 = vpop.permute.xlu0 %449
    %452 = vrot.lane.b32.xlu0 %v407, 112
    %v453 = vpop.permute.xlu0 %452
    %455 = vrot.lane.b32.xlu0 %v407, 104
    %v456 = vpop.permute.xlu0 %455
    %vm458 = vcmask 64512
    %v459 = vsel %vm458, %v206, 0
    %v461 = vsel %vm458, %v306, 0
    %463 = vmatprep.subr.mxu0 0.0
    %464 = vmatpush1.xpose.msra.mxu0 0.0
    %465 = vmatprep.subr.mxu0 0.0
    %466 = vmatpush1.xpose.msra.mxu0 0.0
    %467 = vmatprep.subr.mxu0 0.0
    %468 = vmatpush1.xpose.msra.mxu0 0.0
    %469 = vmatprep.subr.mxu0 0.0
    %470 = vmatpush1.xpose.msra.mxu0 0.0
    %471 = vmatprep.subr.mxu0 0.0
    %472 = vmatpush1.xpose.msra.mxu0 0.0
    %473 = vmatprep.subr.mxu0 0.0
    %474 = vmatpush1.xpose.msra.mxu0 0.0
    %475 = vmatprep.subr.mxu0 0.0
    %476 = vmatpush1.xpose.msra.mxu0 0.0
    %477 = vmatprep.subr.mxu0 0.0
    %478 = vmatpush1.xpose.msra.mxu0 0.0
    %479 = vmatprep.subr.mxu0 0.0
    %480 = vmatpush1.xpose.msra.mxu0 0.0
    %481 = vmatprep.subr.mxu0 0.0
    %482 = vmatpush1.xpose.msra.mxu0 0.0
    %483 = vmatprep.subr.mxu0 0.0
    %484 = vmatpush1.xpose.msra.mxu0 0.0
    %485 = vmatprep.subr.mxu0 0.0
    %486 = vmatpush1.xpose.msra.mxu0 0.0
    %487 = vmatprep.subr.mxu0 0.0
    %488 = vmatpush1.xpose.msra.mxu0 0.0
    %489 = vmatprep.subr.mxu0 0.0
    %490 = vmatpush1.xpose.msra.mxu0 0.0
    %491 = vmatprep.subr.mxu0 0.0
    %492 = vmatpush1.xpose.msra.mxu0 0.0
    %493 = vmatprep.subr.mxu0 0.0
    %494 = vmatpush1.xpose.msra.mxu0 %v461
    %495 = vmatprep.subr.mxu0 0.0
    %496 = vmatpush2.xpose.msra.mxu0 0.0
    %497 = vmatprep.subr.mxu0 0.0
    %498 = vmatpush2.xpose.msra.mxu0 0.0
    %499 = vmatprep.subr.mxu0 0.0
    %500 = vmatpush2.xpose.msra.mxu0 0.0
    %501 = vmatprep.subr.mxu0 0.0
    %502 = vmatpush2.xpose.msra.mxu0 0.0
    %503 = vmatprep.subr.mxu0 0.0
    %504 = vmatpush2.xpose.msra.mxu0 0.0
    %505 = vmatprep.subr.mxu0 0.0
    %506 = vmatpush2.xpose.msra.mxu0 0.0
    %507 = vmatprep.subr.mxu0 0.0
    %508 = vmatpush2.xpose.msra.mxu0 0.0
    %509 = vmatprep.subr.mxu0 0.0
    %510 = vmatpush2.xpose.msra.mxu0 0.0
    %511 = vmatprep.subr.mxu0 0.0
    %512 = vmatpush2.xpose.msra.mxu0 0.0
    %513 = vmatprep.subr.mxu0 0.0
    %514 = vmatpush2.xpose.msra.mxu0 0.0
    %515 = vmatprep.subr.mxu0 0.0
    %516 = vmatpush2.xpose.msra.mxu0 0.0
    %517 = vmatprep.subr.mxu0 0.0
    %518 = vmatpush2.xpose.msra.mxu0 0.0
    %519 = vmatprep.subr.mxu0 0.0
    %520 = vmatpush2.xpose.msra.mxu0 0.0
    %521 = vmatprep.subr.mxu0 0.0
    %522 = vmatpush2.xpose.msra.mxu0 0.0
    %523 = vmatprep.subr.mxu0 0.0
    %524 = vmatpush2.xpose.msra.mxu0 0.0
    %525 = vmatprep.subr.mxu0 0.0
    %526 = vmatpush2.xpose.msra.mxu0 0.0
    %527 = vmatprep.mubr.f32.mxu0 0.0
    %528 = vmatmul.mubr.f32.gmra.mxu0 %v459
    %v529 = vpop.f32.mrf.mxu0
    %v530 = vadd.f32 0.0, %v529
    %v531 = vpop.f32.mrf.mxu0
    %532 = vdwg.mxu0
    %v533 = vsel %vm458, %v412, 0
    %v535 = vsel %vm458, %v426, 0
    %537 = vmatprep.subr.mxu0 0.0
    %538 = vmatpush1.xpose.msra.mxu0 0.0
    %539 = vmatprep.subr.mxu0 0.0
    %540 = vmatpush1.xpose.msra.mxu0 0.0
    %541 = vmatprep.subr.mxu0 0.0
    %542 = vmatpush1.xpose.msra.mxu0 0.0
    %543 = vmatprep.subr.mxu0 0.0
    %544 = vmatpush1.xpose.msra.mxu0 0.0
    %545 = vmatprep.subr.mxu0 0.0
    %546 = vmatpush1.xpose.msra.mxu0 0.0
    %547 = vmatprep.subr.mxu0 0.0
    %548 = vmatpush1.xpose.msra.mxu0 0.0
    %549 = vmatprep.subr.mxu0 0.0
    %550 = vmatpush1.xpose.msra.mxu0 0.0
    %551 = vmatprep.subr.mxu0 0.0
    %552 = vmatpush1.xpose.msra.mxu0 0.0
    %553 = vmatprep.subr.mxu0 0.0
    %554 = vmatpush1.xpose.msra.mxu0 0.0
    %555 = vmatprep.subr.mxu0 0.0
    %556 = vmatpush1.xpose.msra.mxu0 0.0
    %557 = vmatprep.subr.mxu0 0.0
    %558 = vmatpush1.xpose.msra.mxu0 0.0
    %559 = vmatprep.subr.mxu0 0.0
    %560 = vmatpush1.xpose.msra.mxu0 0.0
    %561 = vmatprep.subr.mxu0 0.0
    %562 = vmatpush1.xpose.msra.mxu0 0.0
    %563 = vmatprep.subr.mxu0 0.0
    %564 = vmatpush1.xpose.msra.mxu0 0.0
    %565 = vmatprep.subr.mxu0 0.0
    %566 = vmatpush1.xpose.msra.mxu0 0.0
    %567 = vmatprep.subr.mxu0 0.0
    %568 = vmatpush1.xpose.msra.mxu0 %v535
    %569 = vmatprep.subr.mxu0 0.0
    %570 = vmatpush2.xpose.msra.mxu0 0.0
    %571 = vmatprep.subr.mxu0 0.0
    %572 = vmatpush2.xpose.msra.mxu0 0.0
    %573 = vmatprep.subr.mxu0 0.0
    %574 = vmatpush2.xpose.msra.mxu0 0.0
    %575 = vmatprep.subr.mxu0 0.0
    %576 = vmatpush2.xpose.msra.mxu0 0.0
    %577 = vmatprep.subr.mxu0 0.0
    %578 = vmatpush2.xpose.msra.mxu0 0.0
    %579 = vmatprep.subr.mxu0 0.0
    %580 = vmatpush2.xpose.msra.mxu0 0.0
    %581 = vmatprep.subr.mxu0 0.0
    %582 = vmatpush2.xpose.msra.mxu0 0.0
    %583 = vmatprep.subr.mxu0 0.0
    %584 = vmatpush2.xpose.msra.mxu0 0.0
    %585 = vmatprep.subr.mxu0 0.0
    %586 = vmatpush2.xpose.msra.mxu0 0.0
    %587 = vmatprep.subr.mxu0 0.0
    %588 = vmatpush2.xpose.msra.mxu0 0.0
    %589 = vmatprep.subr.mxu0 0.0
    %590 = vmatpush2.xpose.msra.mxu0 0.0
    %591 = vmatprep.subr.mxu0 0.0
    %592 = vmatpush2.xpose.msra.mxu0 0.0
    %593 = vmatprep.subr.mxu0 0.0
    %594 = vmatpush2.xpose.msra.mxu0 0.0
    %595 = vmatprep.subr.mxu0 0.0
    %596 = vmatpush2.xpose.msra.mxu0 0.0
    %597 = vmatprep.subr.mxu0 0.0
    %598 = vmatpush2.xpose.msra.mxu0 0.0
    %599 = vmatprep.subr.mxu0 0.0
    %600 = vmatpush2.xpose.msra.mxu0 0.0
    %601 = vmatprep.mubr.f32.mxu0 0.0
    %602 = vmatmul.mubr.f32.gmra.mxu0 %v533
    %v603 = vpop.f32.mrf.mxu0
    %v604 = vadd.f32 0.0, %v603
    %v605 = vpop.f32.mrf.mxu0
    %606 = vdwg.mxu0
    %v607 = vsel %vm458, %v414, 0
    %v609 = vsel %vm458, %v428, 0
    %611 = vmatprep.subr.mxu0 0.0
    %612 = vmatpush1.xpose.msra.mxu0 0.0
    %613 = vmatprep.subr.mxu0 0.0
    %614 = vmatpush1.xpose.msra.mxu0 0.0
    %615 = vmatprep.subr.mxu0 0.0
    %616 = vmatpush1.xpose.msra.mxu0 0.0
    %617 = vmatprep.subr.mxu0 0.0
    %618 = vmatpush1.xpose.msra.mxu0 0.0
    %619 = vmatprep.subr.mxu0 0.0
    %620 = vmatpush1.xpose.msra.mxu0 0.0
    %621 = vmatprep.subr.mxu0 0.0
    %622 = vmatpush1.xpose.msra.mxu0 0.0
    %623 = vmatprep.subr.mxu0 0.0
    %624 = vmatpush1.xpose.msra.mxu0 0.0
    %625 = vmatprep.subr.mxu0 0.0
    %626 = vmatpush1.xpose.msra.mxu0 0.0
    %627 = vmatprep.subr.mxu0 0.0
    %628 = vmatpush1.xpose.msra.mxu0 0.0
    %629 = vmatprep.subr.mxu0 0.0
    %630 = vmatpush1.xpose.msra.mxu0 0.0
    %631 = vmatprep.subr.mxu0 0.0
    %632 = vmatpush1.xpose.msra.mxu0 0.0
    %633 = vmatprep.subr.mxu0 0.0
    %634 = vmatpush1.xpose.msra.mxu0 0.0
    %635 = vmatprep.subr.mxu0 0.0
    %636 = vmatpush1.xpose.msra.mxu0 0.0
    %637 = vmatprep.subr.mxu0 0.0
    %638 = vmatpush1.xpose.msra.mxu0 0.0
    %639 = vmatprep.subr.mxu0 0.0
    %640 = vmatpush1.xpose.msra.mxu0 0.0
    %641 = vmatprep.subr.mxu0 0.0
    %642 = vmatpush1.xpose.msra.mxu0 %v609
    %643 = vmatprep.subr.mxu0 0.0
    %644 = vmatpush2.xpose.msra.mxu0 0.0
    %645 = vmatprep.subr.mxu0 0.0
    %646 = vmatpush2.xpose.msra.mxu0 0.0
    %647 = vmatprep.subr.mxu0 0.0
    %648 = vmatpush2.xpose.msra.mxu0 0.0
    %649 = vmatprep.subr.mxu0 0.0
    %650 = vmatpush2.xpose.msra.mxu0 0.0
    %651 = vmatprep.subr.mxu0 0.0
    %652 = vmatpush2.xpose.msra.mxu0 0.0
    %653 = vmatprep.subr.mxu0 0.0
    %654 = vmatpush2.xpose.msra.mxu0 0.0
    %655 = vmatprep.subr.mxu0 0.0
    %656 = vmatpush2.xpose.msra.mxu0 0.0
    %657 = vmatprep.subr.mxu0 0.0
    %658 = vmatpush2.xpose.msra.mxu0 0.0
    %659 = vmatprep.subr.mxu0 0.0
    %660 = vmatpush2.xpose.msra.mxu0 0.0
    %661 = vmatprep.subr.mxu0 0.0
    %662 = vmatpush2.xpose.msra.mxu0 0.0
    %663 = vmatprep.subr.mxu0 0.0
    %664 = vmatpush2.xpose.msra.mxu0 0.0
    %665 = vmatprep.subr.mxu0 0.0
    %666 = vmatpush2.xpose.msra.mxu0 0.0
    %667 = vmatprep.subr.mxu0 0.0
    %668 = vmatpush2.xpose.msra.mxu0 0.0
    %669 = vmatprep.subr.mxu0 0.0
    %670 = vmatpush2.xpose.msra.mxu0 0.0
    %671 = vmatprep.subr.mxu0 0.0
    %672 = vmatpush2.xpose.msra.mxu0 0.0
    %673 = vmatprep.subr.mxu0 0.0
    %674 = vmatpush2.xpose.msra.mxu0 0.0
    %675 = vmatprep.mubr.f32.mxu0 0.0
    %676 = vmatmul.mubr.f32.gmra.mxu0 %v607
    %v677 = vpop.f32.mrf.mxu0
    %v678 = vadd.f32 0.0, %v677
    %v679 = vpop.f32.mrf.mxu0
    %680 = vdwg.mxu0
    %v681 = vsel %vm458, %v416, 0
    %v683 = vsel %vm458, %v430, 0
    %685 = vmatprep.subr.mxu0 0.0
    %686 = vmatpush1.xpose.msra.mxu0 0.0
    %687 = vmatprep.subr.mxu0 0.0
    %688 = vmatpush1.xpose.msra.mxu0 0.0
    %689 = vmatprep.subr.mxu0 0.0
    %690 = vmatpush1.xpose.msra.mxu0 0.0
    %691 = vmatprep.subr.mxu0 0.0
    %692 = vmatpush1.xpose.msra.mxu0 0.0
    %693 = vmatprep.subr.mxu0 0.0
    %694 = vmatpush1.xpose.msra.mxu0 0.0
    %695 = vmatprep.subr.mxu0 0.0
    %696 = vmatpush1.xpose.msra.mxu0 0.0
    %697 = vmatprep.subr.mxu0 0.0
    %698 = vmatpush1.xpose.msra.mxu0 0.0
    %699 = vmatprep.subr.mxu0 0.0
    %700 = vmatpush1.xpose.msra.mxu0 0.0
    %701 = vmatprep.subr.mxu0 0.0
    %702 = vmatpush1.xpose.msra.mxu0 0.0
    %703 = vmatprep.subr.mxu0 0.0
    %704 = vmatpush1.xpose.msra.mxu0 0.0
    %705 = vmatprep.subr.mxu0 0.0
    %706 = vmatpush1.xpose.msra.mxu0 0.0
    %707 = vmatprep.subr.mxu0 0.0
    %708 = vmatpush1.xpose.msra.mxu0 0.0
    %709 = vmatprep.subr.mxu0 0.0
    %710 = vmatpush1.xpose.msra.mxu0 0.0
    %711 = vmatprep.subr.mxu0 0.0
    %712 = vmatpush1.xpose.msra.mxu0 0.0
    %713 = vmatprep.subr.mxu0 0.0
    %714 = vmatpush1.xpose.msra.mxu0 0.0
    %715 = vmatprep.subr.mxu0 0.0
    %716 = vmatpush1.xpose.msra.mxu0 %v683
    %717 = vmatprep.subr.mxu0 0.0
    %718 = vmatpush2.xpose.msra.mxu0 0.0
    %719 = vmatprep.subr.mxu0 0.0
    %720 = vmatpush2.xpose.msra.mxu0 0.0
    %721 = vmatprep.subr.mxu0 0.0
    %722 = vmatpush2.xpose.msra.mxu0 0.0
    %723 = vmatprep.subr.mxu0 0.0
    %724 = vmatpush2.xpose.msra.mxu0 0.0
    %725 = vmatprep.subr.mxu0 0.0
    %726 = vmatpush2.xpose.msra.mxu0 0.0
    %727 = vmatprep.subr.mxu0 0.0
    %728 = vmatpush2.xpose.msra.mxu0 0.0
    %729 = vmatprep.subr.mxu0 0.0
    %730 = vmatpush2.xpose.msra.mxu0 0.0
    %731 = vmatprep.subr.mxu0 0.0
    %732 = vmatpush2.xpose.msra.mxu0 0.0
    %733 = vmatprep.subr.mxu0 0.0
    %734 = vmatpush2.xpose.msra.mxu0 0.0
    %735 = vmatprep.subr.mxu0 0.0
    %736 = vmatpush2.xpose.msra.mxu0 0.0
    %737 = vmatprep.subr.mxu0 0.0
    %738 = vmatpush2.xpose.msra.mxu0 0.0
    %739 = vmatprep.subr.mxu0 0.0
    %740 = vmatpush2.xpose.msra.mxu0 0.0
    %741 = vmatprep.subr.mxu0 0.0
    %742 = vmatpush2.xpose.msra.mxu0 0.0
    %743 = vmatprep.subr.mxu0 0.0
    %744 = vmatpush2.xpose.msra.mxu0 0.0
    %745 = vmatprep.subr.mxu0 0.0
    %746 = vmatpush2.xpose.msra.mxu0 0.0
    %747 = vmatprep.subr.mxu0 0.0
    %748 = vmatpush2.xpose.msra.mxu0 0.0
    %749 = vmatprep.mubr.f32.mxu0 0.0
    %750 = vmatmul.mubr.f32.gmra.mxu0 %v681
    %v751 = vpop.f32.mrf.mxu0
    %v752 = vadd.f32 0.0, %v751
    %v753 = vpop.f32.mrf.mxu0
    %754 = vdwg.mxu0
    %v755 = vsel %vm458, %v211, 0
    %v757 = vsel %vm458, %v311, 0
    %759 = vmatprep.subr.mxu0 0.0
    %760 = vmatpush1.xpose.msra.mxu0 0.0
    %761 = vmatprep.subr.mxu0 0.0
    %762 = vmatpush1.xpose.msra.mxu0 0.0
    %763 = vmatprep.subr.mxu0 0.0
    %764 = vmatpush1.xpose.msra.mxu0 0.0
    %765 = vmatprep.subr.mxu0 0.0
    %766 = vmatpush1.xpose.msra.mxu0 0.0
    %767 = vmatprep.subr.mxu0 0.0
    %768 = vmatpush1.xpose.msra.mxu0 0.0
    %769 = vmatprep.subr.mxu0 0.0
    %770 = vmatpush1.xpose.msra.mxu0 0.0
    %771 = vmatprep.subr.mxu0 0.0
    %772 = vmatpush1.xpose.msra.mxu0 0.0
    %773 = vmatprep.subr.mxu0 0.0
    %774 = vmatpush1.xpose.msra.mxu0 0.0
    %775 = vmatprep.subr.mxu0 0.0
    %776 = vmatpush1.xpose.msra.mxu0 0.0
    %777 = vmatprep.subr.mxu0 0.0
    %778 = vmatpush1.xpose.msra.mxu0 0.0
    %779 = vmatprep.subr.mxu0 0.0
    %780 = vmatpush1.xpose.msra.mxu0 0.0
    %781 = vmatprep.subr.mxu0 0.0
    %782 = vmatpush1.xpose.msra.mxu0 0.0
    %783 = vmatprep.subr.mxu0 0.0
    %784 = vmatpush1.xpose.msra.mxu0 0.0
    %785 = vmatprep.subr.mxu0 0.0
    %786 = vmatpush1.xpose.msra.mxu0 0.0
    %787 = vmatprep.subr.mxu0 0.0
    %788 = vmatpush1.xpose.msra.mxu0 0.0
    %789 = vmatprep.subr.mxu0 0.0
    %790 = vmatpush1.xpose.msra.mxu0 %v757
    %791 = vmatprep.subr.mxu0 0.0
    %792 = vmatpush2.xpose.msra.mxu0 0.0
    %793 = vmatprep.subr.mxu0 0.0
    %794 = vmatpush2.xpose.msra.mxu0 0.0
    %795 = vmatprep.subr.mxu0 0.0
    %796 = vmatpush2.xpose.msra.mxu0 0.0
    %797 = vmatprep.subr.mxu0 0.0
    %798 = vmatpush2.xpose.msra.mxu0 0.0
    %799 = vmatprep.subr.mxu0 0.0
    %800 = vmatpush2.xpose.msra.mxu0 0.0
    %801 = vmatprep.subr.mxu0 0.0
    %802 = vmatpush2.xpose.msra.mxu0 0.0
    %803 = vmatprep.subr.mxu0 0.0
    %804 = vmatpush2.xpose.msra.mxu0 0.0
    %805 = vmatprep.subr.mxu0 0.0
    %806 = vmatpush2.xpose.msra.mxu0 0.0
    %807 = vmatprep.subr.mxu0 0.0
    %808 = vmatpush2.xpose.msra.mxu0 0.0
    %809 = vmatprep.subr.mxu0 0.0
    %810 = vmatpush2.xpose.msra.mxu0 0.0
    %811 = vmatprep.subr.mxu0 0.0
    %812 = vmatpush2.xpose.msra.mxu0 0.0
    %813 = vmatprep.subr.mxu0 0.0
    %814 = vmatpush2.xpose.msra.mxu0 0.0
    %815 = vmatprep.subr.mxu0 0.0
    %816 = vmatpush2.xpose.msra.mxu0 0.0
    %817 = vmatprep.subr.mxu0 0.0
    %818 = vmatpush2.xpose.msra.mxu0 0.0
    %819 = vmatprep.subr.mxu0 0.0
    %820 = vmatpush2.xpose.msra.mxu0 0.0
    %821 = vmatprep.subr.mxu0 0.0
    %822 = vmatpush2.xpose.msra.mxu0 0.0
    %823 = vmatprep.mubr.f32.mxu0 0.0
    %824 = vmatmul.mubr.f32.gmra.mxu0 %v755
    %v825 = vpop.f32.mrf.mxu0
    %v826 = vadd.f32 0.0, %v825
    %v827 = vpop.f32.mrf.mxu0
    %828 = vdwg.mxu0
    %v829 = vsel %vm458, %v419, 0
    %v831 = vsel %vm458, %v433, 0
    %833 = vmatprep.subr.mxu0 0.0
    %834 = vmatpush1.xpose.msra.mxu0 0.0
    %835 = vmatprep.subr.mxu0 0.0
    %836 = vmatpush1.xpose.msra.mxu0 0.0
    %837 = vmatprep.subr.mxu0 0.0
    %838 = vmatpush1.xpose.msra.mxu0 0.0
    %839 = vmatprep.subr.mxu0 0.0
    %840 = vmatpush1.xpose.msra.mxu0 0.0
    %841 = vmatprep.subr.mxu0 0.0
    %842 = vmatpush1.xpose.msra.mxu0 0.0
    %843 = vmatprep.subr.mxu0 0.0
    %844 = vmatpush1.xpose.msra.mxu0 0.0
    %845 = vmatprep.subr.mxu0 0.0
    %846 = vmatpush1.xpose.msra.mxu0 0.0
    %847 = vmatprep.subr.mxu0 0.0
    %848 = vmatpush1.xpose.msra.mxu0 0.0
    %849 = vmatprep.subr.mxu0 0.0
    %850 = vmatpush1.xpose.msra.mxu0 0.0
    %851 = vmatprep.subr.mxu0 0.0
    %852 = vmatpush1.xpose.msra.mxu0 0.0
    %853 = vmatprep.subr.mxu0 0.0
    %854 = vmatpush1.xpose.msra.mxu0 0.0
    %855 = vmatprep.subr.mxu0 0.0
    %856 = vmatpush1.xpose.msra.mxu0 0.0
    %857 = vmatprep.subr.mxu0 0.0
    %858 = vmatpush1.xpose.msra.mxu0 0.0
    %859 = vmatprep.subr.mxu0 0.0
    %860 = vmatpush1.xpose.msra.mxu0 0.0
    %861 = vmatprep.subr.mxu0 0.0
    %862 = vmatpush1.xpose.msra.mxu0 0.0
    %863 = vmatprep.subr.mxu0 0.0
    %864 = vmatpush1.xpose.msra.mxu0 %v831
    %865 = vmatprep.subr.mxu0 0.0
    %866 = vmatpush2.xpose.msra.mxu0 0.0
    %867 = vmatprep.subr.mxu0 0.0
    %868 = vmatpush2.xpose.msra.mxu0 0.0
    %869 = vmatprep.subr.mxu0 0.0
    %870 = vmatpush2.xpose.msra.mxu0 0.0
    %871 = vmatprep.subr.mxu0 0.0
    %872 = vmatpush2.xpose.msra.mxu0 0.0
    %873 = vmatprep.subr.mxu0 0.0
    %874 = vmatpush2.xpose.msra.mxu0 0.0
    %875 = vmatprep.subr.mxu0 0.0
    %876 = vmatpush2.xpose.msra.mxu0 0.0
    %877 = vmatprep.subr.mxu0 0.0
    %878 = vmatpush2.xpose.msra.mxu0 0.0
    %879 = vmatprep.subr.mxu0 0.0
    %880 = vmatpush2.xpose.msra.mxu0 0.0
    %881 = vmatprep.subr.mxu0 0.0
    %882 = vmatpush2.xpose.msra.mxu0 0.0
    %883 = vmatprep.subr.mxu0 0.0
    %884 = vmatpush2.xpose.msra.mxu0 0.0
    %885 = vmatprep.subr.mxu0 0.0
    %886 = vmatpush2.xpose.msra.mxu0 0.0
    %887 = vmatprep.subr.mxu0 0.0
    %888 = vmatpush2.xpose.msra.mxu0 0.0
    %889 = vmatprep.subr.mxu0 0.0
    %890 = vmatpush2.xpose.msra.mxu0 0.0
    %891 = vmatprep.subr.mxu0 0.0
    %892 = vmatpush2.xpose.msra.mxu0 0.0
    %893 = vmatprep.subr.mxu0 0.0
    %894 = vmatpush2.xpose.msra.mxu0 0.0
    %895 = vmatprep.subr.mxu0 0.0
    %896 = vmatpush2.xpose.msra.mxu0 0.0
    %897 = vmatprep.mubr.f32.mxu0 0.0
    %898 = vmatmul.mubr.f32.gmra.mxu0 %v829
    %v899 = vpop.f32.mrf.mxu0
    %v900 = vadd.f32 0.0, %v899
    %v901 = vpop.f32.mrf.mxu0
    %902 = vdwg.mxu0
    %v903 = vsel %vm458, %v421, 0
    %v905 = vsel %vm458, %v435, 0
    %907 = vmatprep.subr.mxu0 0.0
    %908 = vmatpush1.xpose.msra.mxu0 0.0
    %909 = vmatprep.subr.mxu0 0.0
    %910 = vmatpush1.xpose.msra.mxu0 0.0
    %911 = vmatprep.subr.mxu0 0.0
    %912 = vmatpush1.xpose.msra.mxu0 0.0
    %913 = vmatprep.subr.mxu0 0.0
    %914 = vmatpush1.xpose.msra.mxu0 0.0
    %915 = vmatprep.subr.mxu0 0.0
    %916 = vmatpush1.xpose.msra.mxu0 0.0
    %917 = vmatprep.subr.mxu0 0.0
    %918 = vmatpush1.xpose.msra.mxu0 0.0
    %919 = vmatprep.subr.mxu0 0.0
    %920 = vmatpush1.xpose.msra.mxu0 0.0
    %921 = vmatprep.subr.mxu0 0.0
    %922 = vmatpush1.xpose.msra.mxu0 0.0
    %923 = vmatprep.subr.mxu0 0.0
    %924 = vmatpush1.xpose.msra.mxu0 0.0
    %925 = vmatprep.subr.mxu0 0.0
    %926 = vmatpush1.xpose.msra.mxu0 0.0
    %927 = vmatprep.subr.mxu0 0.0
    %928 = vmatpush1.xpose.msra.mxu0 0.0
    %929 = vmatprep.subr.mxu0 0.0
    %930 = vmatpush1.xpose.msra.mxu0 0.0
    %931 = vmatprep.subr.mxu0 0.0
    %932 = vmatpush1.xpose.msra.mxu0 0.0
    %933 = vmatprep.subr.mxu0 0.0
    %934 = vmatpush1.xpose.msra.mxu0 0.0
    %935 = vmatprep.subr.mxu0 0.0
    %936 = vmatpush1.xpose.msra.mxu0 0.0
    %937 = vmatprep.subr.mxu0 0.0
    %938 = vmatpush1.xpose.msra.mxu0 %v905
    %939 = vmatprep.subr.mxu0 0.0
    %940 = vmatpush2.xpose.msra.mxu0 0.0
    %941 = vmatprep.subr.mxu0 0.0
    %942 = vmatpush2.xpose.msra.mxu0 0.0
    %943 = vmatprep.subr.mxu0 0.0
    %944 = vmatpush2.xpose.msra.mxu0 0.0
    %945 = vmatprep.subr.mxu0 0.0
    %946 = vmatpush2.xpose.msra.mxu0 0.0
    %947 = vmatprep.subr.mxu0 0.0
    %948 = vmatpush2.xpose.msra.mxu0 0.0
    %949 = vmatprep.subr.mxu0 0.0
    %950 = vmatpush2.xpose.msra.mxu0 0.0
    %951 = vmatprep.subr.mxu0 0.0
    %952 = vmatpush2.xpose.msra.mxu0 0.0
    %953 = vmatprep.subr.mxu0 0.0
    %954 = vmatpush2.xpose.msra.mxu0 0.0
    %955 = vmatprep.subr.mxu0 0.0
    %956 = vmatpush2.xpose.msra.mxu0 0.0
    %957 = vmatprep.subr.mxu0 0.0
    %958 = vmatpush2.xpose.msra.mxu0 0.0
    %959 = vmatprep.subr.mxu0 0.0
    %960 = vmatpush2.xpose.msra.mxu0 0.0
    %961 = vmatprep.subr.mxu0 0.0
    %962 = vmatpush2.xpose.msra.mxu0 0.0
    %963 = vmatprep.subr.mxu0 0.0
    %964 = vmatpush2.xpose.msra.mxu0 0.0
    %965 = vmatprep.subr.mxu0 0.0
    %966 = vmatpush2.xpose.msra.mxu0 0.0
    %967 = vmatprep.subr.mxu0 0.0
    %968 = vmatpush2.xpose.msra.mxu0 0.0
    %969 = vmatprep.subr.mxu0 0.0
    %970 = vmatpush2.xpose.msra.mxu0 0.0
    %971 = vmatprep.mubr.f32.mxu0 0.0
    %972 = vmatmul.mubr.f32.gmra.mxu0 %v903
    %v973 = vpop.f32.mrf.mxu0
    %v974 = vadd.f32 0.0, %v973
    %v975 = vpop.f32.mrf.mxu0
    %976 = vdwg.mxu0
    %v977 = vsel %vm458, %v423, 0
    %v979 = vsel %vm458, %v437, 0
    %981 = vmatprep.subr.mxu0 0.0
    %982 = vmatpush1.xpose.msra.mxu0 0.0
    %983 = vmatprep.subr.mxu0 0.0
    %984 = vmatpush1.xpose.msra.mxu0 0.0
    %985 = vmatprep.subr.mxu0 0.0
    %986 = vmatpush1.xpose.msra.mxu0 0.0
    %987 = vmatprep.subr.mxu0 0.0
    %988 = vmatpush1.xpose.msra.mxu0 0.0
    %989 = vmatprep.subr.mxu0 0.0
    %990 = vmatpush1.xpose.msra.mxu0 0.0
    %991 = vmatprep.subr.mxu0 0.0
    %992 = vmatpush1.xpose.msra.mxu0 0.0
    %993 = vmatprep.subr.mxu0 0.0
    %994 = vmatpush1.xpose.msra.mxu0 0.0
    %995 = vmatprep.subr.mxu0 0.0
    %996 = vmatpush1.xpose.msra.mxu0 0.0
    %997 = vmatprep.subr.mxu0 0.0
    %998 = vmatpush1.xpose.msra.mxu0 0.0
    %999 = vmatprep.subr.mxu0 0.0
    %1000 = vmatpush1.xpose.msra.mxu0 0.0
    %1001 = vmatprep.subr.mxu0 0.0
    %1002 = vmatpush1.xpose.msra.mxu0 0.0
    %1003 = vmatprep.subr.mxu0 0.0
    %1004 = vmatpush1.xpose.msra.mxu0 0.0
    %1005 = vmatprep.subr.mxu0 0.0
    %1006 = vmatpush1.xpose.msra.mxu0 0.0
    %1007 = vmatprep.subr.mxu0 0.0
    %1008 = vmatpush1.xpose.msra.mxu0 0.0
    %1009 = vmatprep.subr.mxu0 0.0
    %1010 = vmatpush1.xpose.msra.mxu0 0.0
    %1011 = vmatprep.subr.mxu0 0.0
    %1012 = vmatpush1.xpose.msra.mxu0 %v979
    %1013 = vmatprep.subr.mxu0 0.0
    %1014 = vmatpush2.xpose.msra.mxu0 0.0
    %1015 = vmatprep.subr.mxu0 0.0
    %1016 = vmatpush2.xpose.msra.mxu0 0.0
    %1017 = vmatprep.subr.mxu0 0.0
    %1018 = vmatpush2.xpose.msra.mxu0 0.0
    %1019 = vmatprep.subr.mxu0 0.0
    %1020 = vmatpush2.xpose.msra.mxu0 0.0
    %1021 = vmatprep.subr.mxu0 0.0
    %1022 = vmatpush2.xpose.msra.mxu0 0.0
    %1023 = vmatprep.subr.mxu0 0.0
    %1024 = vmatpush2.xpose.msra.mxu0 0.0
    %1025 = vmatprep.subr.mxu0 0.0
    %1026 = vmatpush2.xpose.msra.mxu0 0.0
    %1027 = vmatprep.subr.mxu0 0.0
    %1028 = vmatpush2.xpose.msra.mxu0 0.0
    %1029 = vmatprep.subr.mxu0 0.0
    %1030 = vmatpush2.xpose.msra.mxu0 0.0
    %1031 = vmatprep.subr.mxu0 0.0
    %1032 = vmatpush2.xpose.msra.mxu0 0.0
    %1033 = vmatprep.subr.mxu0 0.0
    %1034 = vmatpush2.xpose.msra.mxu0 0.0
    %1035 = vmatprep.subr.mxu0 0.0
    %1036 = vmatpush2.xpose.msra.mxu0 0.0
    %1037 = vmatprep.subr.mxu0 0.0
    %1038 = vmatpush2.xpose.msra.mxu0 0.0
    %1039 = vmatprep.subr.mxu0 0.0
    %1040 = vmatpush2.xpose.msra.mxu0 0.0
    %1041 = vmatprep.subr.mxu0 0.0
    %1042 = vmatpush2.xpose.msra.mxu0 0.0
    %1043 = vmatprep.subr.mxu0 0.0
    %1044 = vmatpush2.xpose.msra.mxu0 0.0
    %1045 = vmatprep.mubr.f32.mxu0 0.0
    %1046 = vmatmul.mubr.f32.gmra.mxu0 %v977
    %v1047 = vpop.f32.mrf.mxu0
    %v1048 = vadd.f32 0.0, %v1047
    %v1049 = vpop.f32.mrf.mxu0
    %1050 = vdwg.mxu0
    %v1051 = vld [vmem:[#allocation8] sm:$0xff]
    %v1052 = vld [vmem:[#allocation8 + $0x8] sm:$0xff]
    %vm1053 = vcmp.gt.f32.partialorder %v1051, 0.5
    %vm1054 = vcmp.gt.f32.partialorder %v1052, 0.5
    %v1055 = vsel %vm1053, 1, 0
    %v1056 = vsel %vm1054, 1, 0
    %vm1057 = vcmp.eq.s32.totalorder %v1055, 1
    %vm1058 = vcmp.eq.s32.totalorder %v1056, 1
    %v1059 = vsel %vm1057, -1e+09, %v530
    %v1060 = vsel %vm1057, -1e+09, %v604
    %v1061 = vsel %vm1057, -1e+09, %v678
    %v1062 = vsel %vm1057, -1e+09, %v752
    %v1063 = vsel %vm1058, -1e+09, %v826
    %v1064 = vsel %vm1058, -1e+09, %v900
    %v1065 = vsel %vm1058, -1e+09, %v974
    %v1066 = vsel %vm1058, -1e+09, %v1048
    %v1067 = vsel %vm458, %v1059, -inf
    %1068 = vmax.xlane.f32.xlu0 %v1067
    %v1069 = vpop.xlane.xlu0 %1068
    %v1070 = vsel %vm458, %v1060, -inf
    %1071 = vmax.xlane.f32.xlu0 %v1070
    %v1072 = vpop.xlane.xlu0 %1071
    %v1073 = vsel %vm458, %v1061, -inf
    %1074 = vmax.xlane.f32.xlu0 %v1073
    %v1075 = vpop.xlane.xlu0 %1074
    %v1076 = vsel %vm458, %v1062, -inf
    %1077 = vmax.xlane.f32.xlu0 %v1076
    %v1078 = vpop.xlane.xlu0 %1077
    %v1079 = vsel %vm458, %v1063, -inf
    %1080 = vmax.xlane.f32.xlu0 %v1079
    %v1081 = vpop.xlane.xlu0 %1080
    %v1082 = vsel %vm458, %v1064, -inf
    %1083 = vmax.xlane.f32.xlu0 %v1082
    %v1084 = vpop.xlane.xlu0 %1083
    %v1085 = vsel %vm458, %v1065, -inf
    %1086 = vmax.xlane.f32.xlu0 %v1085
    %v1087 = vpop.xlane.xlu0 %1086
    %v1088 = vsel %vm458, %v1066, -inf
    %1089 = vmax.xlane.f32.xlu0 %v1088
    %v1090 = vpop.xlane.xlu0 %1089
    %v1091 = vsub.f32 %v1059, %v1069
    %v1092 = vsub.f32 %v1060, %v1072
    %v1093 = vsub.f32 %v1061, %v1075
    %v1094 = vsub.f32 %v1062, %v1078
    %v1095 = vsub.f32 %v1063, %v1081
    %v1096 = vsub.f32 %v1064, %v1084
    %v1097 = vsub.f32 %v1065, %v1087
    %v1098 = vsub.f32 %v1066, %v1090
    %v1099 = vmul.f32 %v1091, 1.442695
    %v1100 = vpow.pop %v1099
    %v1101 = vmul.f32 %v1092, 1.442695
    %v1102 = vpow.pop %v1101
    %v1103 = vmul.f32 %v1093, 1.442695
    %v1104 = vpow.pop %v1103
    %v1105 = vmul.f32 %v1094, 1.442695
    %v1106 = vpow.pop %v1105
    %v1107 = vmul.f32 %v1095, 1.442695
    %v1108 = vpow.pop %v1107
    %v1109 = vmul.f32 %v1096, 1.442695
    %v1110 = vpow.pop %v1109
    %v1111 = vmul.f32 %v1097, 1.442695
    %v1112 = vpow.pop %v1111
    %v1113 = vmul.f32 %v1098, 1.442695
    %v1114 = vpow.pop %v1113
    %v1115 = vsel %vm458, %v1100, 0.0
    %1116 = vadd.xlane.f32.xlu0 %v1115
    %v1117 = vpop.xlane.xlu0 %1116
    %v1118 = vsel %vm458, %v1102, 0.0
    %1119 = vadd.xlane.f32.xlu0 %v1118
    %v1120 = vpop.xlane.xlu0 %1119
    %v1121 = vsel %vm458, %v1104, 0.0
    %1122 = vadd.xlane.f32.xlu0 %v1121
    %v1123 = vpop.xlane.xlu0 %1122
    %v1124 = vsel %vm458, %v1106, 0.0
    %1125 = vadd.xlane.f32.xlu0 %v1124
    %v1126 = vpop.xlane.xlu0 %1125
    %v1127 = vsel %vm458, %v1108, 0.0
    %1128 = vadd.xlane.f32.xlu0 %v1127
    %v1129 = vpop.xlane.xlu0 %1128
    %v1130 = vsel %vm458, %v1110, 0.0
    %1131 = vadd.xlane.f32.xlu0 %v1130
    %v1132 = vpop.xlane.xlu0 %1131
    %v1133 = vsel %vm458, %v1112, 0.0
    %1134 = vadd.xlane.f32.xlu0 %v1133
    %v1135 = vpop.xlane.xlu0 %1134
    %v1136 = vsel %vm458, %v1114, 0.0
    %1137 = vadd.xlane.f32.xlu0 %v1136
    %v1138 = vpop.xlane.xlu0 %1137
    %v1139 = vrcp.pop %v1117
    %v1140 = vrcp.pop %v1120
    %v1141 = vrcp.pop %v1123
    %v1142 = vrcp.pop %v1126
    %v1143 = vrcp.pop %v1129
    %v1144 = vrcp.pop %v1132
    %v1145 = vrcp.pop %v1135
    %v1146 = vrcp.pop %v1138
    %v1147 = vmul.f32 %v1100, %v1139
    %v1148 = vmul.f32 %v1102, %v1140
    %v1149 = vmul.f32 %v1104, %v1141
    %v1150 = vmul.f32 %v1106, %v1142
    %v1151 = vmul.f32 %v1108, %v1143
    %v1152 = vmul.f32 %v1110, %v1144
    %v1153 = vmul.f32 %v1112, %v1145
    %v1154 = vmul.f32 %v1114, %v1146
    %1155 = vst.msk [vmem:[#allocation14] sm:$0xff] %vm458, %v1147
    %1156 = vst.msk [vmem:[#allocation14 + $0x8] sm:$0xff] %vm458, %v1148
    %1157 = vst.msk [vmem:[#allocation14 + $0x10] sm:$0xff] %vm458, %v1149
    %1158 = vst.msk [vmem:[#allocation14 + $0x18] sm:$0xff] %vm458, %v1150
    %1159 = vst.msk [vmem:[#allocation14 + $0x20] sm:$0xff] %vm458, %v1151
    %1160 = vst.msk [vmem:[#allocation14 + $0x28] sm:$0xff] %vm458, %v1152
    %1161 = vst.msk [vmem:[#allocation14 + $0x30] sm:$0xff] %vm458, %v1153
    %1162 = vst.msk [vmem:[#allocation14 + $0x38] sm:$0xff] %vm458, %v1154
    %v1164 = vsel %vm458, %v1147, 0
    %1166 = vmatprep.subr.mxu0 0.0
    %1167 = vmatpush1.msra.mxu0 0.0
    %1168 = vmatprep.subr.mxu0 0.0
    %1169 = vmatpush1.msra.mxu0 0.0
    %1170 = vmatprep.subr.mxu0 0.0
    %1171 = vmatpush1.msra.mxu0 0.0
    %1172 = vmatprep.subr.mxu0 0.0
    %1173 = vmatpush1.msra.mxu0 0.0
    %1174 = vmatprep.subr.mxu0 0.0
    %1175 = vmatpush1.msra.mxu0 0.0
    %1176 = vmatprep.subr.mxu0 0.0
    %1177 = vmatpush1.msra.mxu0 0.0
    %1178 = vmatprep.subr.mxu0 0.0
    %1179 = vmatpush1.msra.mxu0 0.0
    %1180 = vmatprep.subr.mxu0 0.0
    %1181 = vmatpush1.msra.mxu0 0.0
    %1182 = vmatprep.subr.mxu0 0.0
    %1183 = vmatpush1.msra.mxu0 0.0
    %1184 = vmatprep.subr.mxu0 0.0
    %1185 = vmatpush1.msra.mxu0 0.0
    %1186 = vmatprep.subr.mxu0 0.0
    %1187 = vmatpush1.msra.mxu0 0.0
    %1188 = vmatprep.subr.mxu0 0.0
    %1189 = vmatpush1.msra.mxu0 0.0
    %1190 = vmatprep.subr.mxu0 0.0
    %1191 = vmatpush1.msra.mxu0 0.0
    %1192 = vmatprep.subr.mxu0 0.0
    %1193 = vmatpush1.msra.mxu0 0.0
    %1194 = vmatprep.subr.mxu0 0.0
    %1195 = vmatpush1.msra.mxu0 0.0
    %1196 = vmatprep.subr.mxu0 0.0
    %1197 = vmatpush1.msra.mxu0 %v402
    %1198 = vmatprep.subr.mxu0 0.0
    %1199 = vmatpush2.msra.mxu0 0.0
    %1200 = vmatprep.subr.mxu0 0.0
    %1201 = vmatpush2.msra.mxu0 0.0
    %1202 = vmatprep.subr.mxu0 0.0
    %1203 = vmatpush2.msra.mxu0 0.0
    %1204 = vmatprep.subr.mxu0 0.0
    %1205 = vmatpush2.msra.mxu0 0.0
    %1206 = vmatprep.subr.mxu0 0.0
    %1207 = vmatpush2.msra.mxu0 0.0
    %1208 = vmatprep.subr.mxu0 0.0
    %1209 = vmatpush2.msra.mxu0 0.0
    %1210 = vmatprep.subr.mxu0 0.0
    %1211 = vmatpush2.msra.mxu0 0.0
    %1212 = vmatprep.subr.mxu0 0.0
    %1213 = vmatpush2.msra.mxu0 0.0
    %1214 = vmatprep.subr.mxu0 0.0
    %1215 = vmatpush2.msra.mxu0 0.0
    %1216 = vmatprep.subr.mxu0 0.0
    %1217 = vmatpush2.msra.mxu0 0.0
    %1218 = vmatprep.subr.mxu0 0.0
    %1219 = vmatpush2.msra.mxu0 0.0
    %1220 = vmatprep.subr.mxu0 0.0
    %1221 = vmatpush2.msra.mxu0 0.0
    %1222 = vmatprep.subr.mxu0 0.0
    %1223 = vmatpush2.msra.mxu0 0.0
    %1224 = vmatprep.subr.mxu0 0.0
    %1225 = vmatpush2.msra.mxu0 0.0
    %1226 = vmatprep.subr.mxu0 0.0
    %1227 = vmatpush2.msra.mxu0 0.0
    %1228 = vmatprep.subr.mxu0 0.0
    %1229 = vmatpush2.msra.mxu0 0.0
    %1230 = vmatprep.mubr.f32.mxu0 0.0
    %1231 = vmatmul.mubr.f32.gmra.mxu0 %v1164
    %v1232 = vpop.f32.mrf.mxu0
    %v1233 = vadd.f32 0.0, %v1232
    %v1234 = vpop.f32.mrf.mxu0
    %1235 = vdwg.mxu0
    %v1237 = vsel %vm458, %v1148, 0
    %1239 = vmatprep.subr.mxu0 0.0
    %1240 = vmatpush1.msra.mxu0 0.0
    %1241 = vmatprep.subr.mxu0 0.0
    %1242 = vmatpush1.msra.mxu0 0.0
    %1243 = vmatprep.subr.mxu0 0.0
    %1244 = vmatpush1.msra.mxu0 0.0
    %1245 = vmatprep.subr.mxu0 0.0
    %1246 = vmatpush1.msra.mxu0 0.0
    %1247 = vmatprep.subr.mxu0 0.0
    %1248 = vmatpush1.msra.mxu0 0.0
    %1249 = vmatprep.subr.mxu0 0.0
    %1250 = vmatpush1.msra.mxu0 0.0
    %1251 = vmatprep.subr.mxu0 0.0
    %1252 = vmatpush1.msra.mxu0 0.0
    %1253 = vmatprep.subr.mxu0 0.0
    %1254 = vmatpush1.msra.mxu0 0.0
    %1255 = vmatprep.subr.mxu0 0.0
    %1256 = vmatpush1.msra.mxu0 0.0
    %1257 = vmatprep.subr.mxu0 0.0
    %1258 = vmatpush1.msra.mxu0 0.0
    %1259 = vmatprep.subr.mxu0 0.0
    %1260 = vmatpush1.msra.mxu0 0.0
    %1261 = vmatprep.subr.mxu0 0.0
    %1262 = vmatpush1.msra.mxu0 0.0
    %1263 = vmatprep.subr.mxu0 0.0
    %1264 = vmatpush1.msra.mxu0 0.0
    %1265 = vmatprep.subr.mxu0 0.0
    %1266 = vmatpush1.msra.mxu0 0.0
    %1267 = vmatprep.subr.mxu0 0.0
    %1268 = vmatpush1.msra.mxu0 0.0
    %1269 = vmatprep.subr.mxu0 0.0
    %1270 = vmatpush1.msra.mxu0 %v440
    %1271 = vmatprep.subr.mxu0 0.0
    %1272 = vmatpush2.msra.mxu0 0.0
    %1273 = vmatprep.subr.mxu0 0.0
    %1274 = vmatpush2.msra.mxu0 0.0
    %1275 = vmatprep.subr.mxu0 0.0
    %1276 = vmatpush2.msra.mxu0 0.0
    %1277 = vmatprep.subr.mxu0 0.0
    %1278 = vmatpush2.msra.mxu0 0.0
    %1279 = vmatprep.subr.mxu0 0.0
    %1280 = vmatpush2.msra.mxu0 0.0
    %1281 = vmatprep.subr.mxu0 0.0
    %1282 = vmatpush2.msra.mxu0 0.0
    %1283 = vmatprep.subr.mxu0 0.0
    %1284 = vmatpush2.msra.mxu0 0.0
    %1285 = vmatprep.subr.mxu0 0.0
    %1286 = vmatpush2.msra.mxu0 0.0
    %1287 = vmatprep.subr.mxu0 0.0
    %1288 = vmatpush2.msra.mxu0 0.0
    %1289 = vmatprep.subr.mxu0 0.0
    %1290 = vmatpush2.msra.mxu0 0.0
    %1291 = vmatprep.subr.mxu0 0.0
    %1292 = vmatpush2.msra.mxu0 0.0
    %1293 = vmatprep.subr.mxu0 0.0
    %1294 = vmatpush2.msra.mxu0 0.0
    %1295 = vmatprep.subr.mxu0 0.0
    %1296 = vmatpush2.msra.mxu0 0.0
    %1297 = vmatprep.subr.mxu0 0.0
    %1298 = vmatpush2.msra.mxu0 0.0
    %1299 = vmatprep.subr.mxu0 0.0
    %1300 = vmatpush2.msra.mxu0 0.0
    %1301 = vmatprep.subr.mxu0 0.0
    %1302 = vmatpush2.msra.mxu0 0.0
    %1303 = vmatprep.mubr.f32.mxu0 0.0
    %1304 = vmatmul.mubr.f32.gmra.mxu0 %v1237
    %v1305 = vpop.f32.mrf.mxu0
    %v1306 = vadd.f32 0.0, %v1305
    %v1307 = vpop.f32.mrf.mxu0
    %1308 = vdwg.mxu0
    %v1310 = vsel %vm458, %v1149, 0
    %1312 = vmatprep.subr.mxu0 0.0
    %1313 = vmatpush1.msra.mxu0 0.0
    %1314 = vmatprep.subr.mxu0 0.0
    %1315 = vmatpush1.msra.mxu0 0.0
    %1316 = vmatprep.subr.mxu0 0.0
    %1317 = vmatpush1.msra.mxu0 0.0
    %1318 = vmatprep.subr.mxu0 0.0
    %1319 = vmatpush1.msra.mxu0 0.0
    %1320 = vmatprep.subr.mxu0 0.0
    %1321 = vmatpush1.msra.mxu0 0.0
    %1322 = vmatprep.subr.mxu0 0.0
    %1323 = vmatpush1.msra.mxu0 0.0
    %1324 = vmatprep.subr.mxu0 0.0
    %1325 = vmatpush1.msra.mxu0 0.0
    %1326 = vmatprep.subr.mxu0 0.0
    %1327 = vmatpush1.msra.mxu0 0.0
    %1328 = vmatprep.subr.mxu0 0.0
    %1329 = vmatpush1.msra.mxu0 0.0
    %1330 = vmatprep.subr.mxu0 0.0
    %1331 = vmatpush1.msra.mxu0 0.0
    %1332 = vmatprep.subr.mxu0 0.0
    %1333 = vmatpush1.msra.mxu0 0.0
    %1334 = vmatprep.subr.mxu0 0.0
    %1335 = vmatpush1.msra.mxu0 0.0
    %1336 = vmatprep.subr.mxu0 0.0
    %1337 = vmatpush1.msra.mxu0 0.0
    %1338 = vmatprep.subr.mxu0 0.0
    %1339 = vmatpush1.msra.mxu0 0.0
    %1340 = vmatprep.subr.mxu0 0.0
    %1341 = vmatpush1.msra.mxu0 0.0
    %1342 = vmatprep.subr.mxu0 0.0
    %1343 = vmatpush1.msra.mxu0 %v443
    %1344 = vmatprep.subr.mxu0 0.0
    %1345 = vmatpush2.msra.mxu0 0.0
    %1346 = vmatprep.subr.mxu0 0.0
    %1347 = vmatpush2.msra.mxu0 0.0
    %1348 = vmatprep.subr.mxu0 0.0
    %1349 = vmatpush2.msra.mxu0 0.0
    %1350 = vmatprep.subr.mxu0 0.0
    %1351 = vmatpush2.msra.mxu0 0.0
    %1352 = vmatprep.subr.mxu0 0.0
    %1353 = vmatpush2.msra.mxu0 0.0
    %1354 = vmatprep.subr.mxu0 0.0
    %1355 = vmatpush2.msra.mxu0 0.0
    %1356 = vmatprep.subr.mxu0 0.0
    %1357 = vmatpush2.msra.mxu0 0.0
    %1358 = vmatprep.subr.mxu0 0.0
    %1359 = vmatpush2.msra.mxu0 0.0
    %1360 = vmatprep.subr.mxu0 0.0
    %1361 = vmatpush2.msra.mxu0 0.0
    %1362 = vmatprep.subr.mxu0 0.0
    %1363 = vmatpush2.msra.mxu0 0.0
    %1364 = vmatprep.subr.mxu0 0.0
    %1365 = vmatpush2.msra.mxu0 0.0
    %1366 = vmatprep.subr.mxu0 0.0
    %1367 = vmatpush2.msra.mxu0 0.0
    %1368 = vmatprep.subr.mxu0 0.0
    %1369 = vmatpush2.msra.mxu0 0.0
    %1370 = vmatprep.subr.mxu0 0.0
    %1371 = vmatpush2.msra.mxu0 0.0
    %1372 = vmatprep.subr.mxu0 0.0
    %1373 = vmatpush2.msra.mxu0 0.0
    %1374 = vmatprep.subr.mxu0 0.0
    %1375 = vmatpush2.msra.mxu0 0.0
    %1376 = vmatprep.mubr.f32.mxu0 0.0
    %1377 = vmatmul.mubr.f32.gmra.mxu0 %v1310
    %v1378 = vpop.f32.mrf.mxu0
    %v1379 = vadd.f32 0.0, %v1378
    %v1380 = vpop.f32.mrf.mxu0
    %1381 = vdwg.mxu0
    %v1383 = vsel %vm458, %v1150, 0
    %1385 = vmatprep.subr.mxu0 0.0
    %1386 = vmatpush1.msra.mxu0 0.0
    %1387 = vmatprep.subr.mxu0 0.0
    %1388 = vmatpush1.msra.mxu0 0.0
    %1389 = vmatprep.subr.mxu0 0.0
    %1390 = vmatpush1.msra.mxu0 0.0
    %1391 = vmatprep.subr.mxu0 0.0
    %1392 = vmatpush1.msra.mxu0 0.0
    %1393 = vmatprep.subr.mxu0 0.0
    %1394 = vmatpush1.msra.mxu0 0.0
    %1395 = vmatprep.subr.mxu0 0.0
    %1396 = vmatpush1.msra.mxu0 0.0
    %1397 = vmatprep.subr.mxu0 0.0
    %1398 = vmatpush1.msra.mxu0 0.0
    %1399 = vmatprep.subr.mxu0 0.0
    %1400 = vmatpush1.msra.mxu0 0.0
    %1401 = vmatprep.subr.mxu0 0.0
    %1402 = vmatpush1.msra.mxu0 0.0
    %1403 = vmatprep.subr.mxu0 0.0
    %1404 = vmatpush1.msra.mxu0 0.0
    %1405 = vmatprep.subr.mxu0 0.0
    %1406 = vmatpush1.msra.mxu0 0.0
    %1407 = vmatprep.subr.mxu0 0.0
    %1408 = vmatpush1.msra.mxu0 0.0
    %1409 = vmatprep.subr.mxu0 0.0
    %1410 = vmatpush1.msra.mxu0 0.0
    %1411 = vmatprep.subr.mxu0 0.0
    %1412 = vmatpush1.msra.mxu0 0.0
    %1413 = vmatprep.subr.mxu0 0.0
    %1414 = vmatpush1.msra.mxu0 0.0
    %1415 = vmatprep.subr.mxu0 0.0
    %1416 = vmatpush1.msra.mxu0 %v446
    %1417 = vmatprep.subr.mxu0 0.0
    %1418 = vmatpush2.msra.mxu0 0.0
    %1419 = vmatprep.subr.mxu0 0.0
    %1420 = vmatpush2.msra.mxu0 0.0
    %1421 = vmatprep.subr.mxu0 0.0
    %1422 = vmatpush2.msra.mxu0 0.0
    %1423 = vmatprep.subr.mxu0 0.0
    %1424 = vmatpush2.msra.mxu0 0.0
    %1425 = vmatprep.subr.mxu0 0.0
    %1426 = vmatpush2.msra.mxu0 0.0
    %1427 = vmatprep.subr.mxu0 0.0
    %1428 = vmatpush2.msra.mxu0 0.0
    %1429 = vmatprep.subr.mxu0 0.0
    %1430 = vmatpush2.msra.mxu0 0.0
    %1431 = vmatprep.subr.mxu0 0.0
    %1432 = vmatpush2.msra.mxu0 0.0
    %1433 = vmatprep.subr.mxu0 0.0
    %1434 = vmatpush2.msra.mxu0 0.0
    %1435 = vmatprep.subr.mxu0 0.0
    %1436 = vmatpush2.msra.mxu0 0.0
    %1437 = vmatprep.subr.mxu0 0.0
    %1438 = vmatpush2.msra.mxu0 0.0
    %1439 = vmatprep.subr.mxu0 0.0
    %1440 = vmatpush2.msra.mxu0 0.0
    %1441 = vmatprep.subr.mxu0 0.0
    %1442 = vmatpush2.msra.mxu0 0.0
    %1443 = vmatprep.subr.mxu0 0.0
    %1444 = vmatpush2.msra.mxu0 0.0
    %1445 = vmatprep.subr.mxu0 0.0
    %1446 = vmatpush2.msra.mxu0 0.0
    %1447 = vmatprep.subr.mxu0 0.0
    %1448 = vmatpush2.msra.mxu0 0.0
    %1449 = vmatprep.mubr.f32.mxu0 0.0
    %1450 = vmatmul.mubr.f32.gmra.mxu0 %v1383
    %v1451 = vpop.f32.mrf.mxu0
    %v1452 = vadd.f32 0.0, %v1451
    %v1453 = vpop.f32.mrf.mxu0
    %1454 = vdwg.mxu0
    %v1456 = vsel %vm458, %v1151, 0
    %1458 = vmatprep.subr.mxu0 0.0
    %1459 = vmatpush1.msra.mxu0 0.0
    %1460 = vmatprep.subr.mxu0 0.0
    %1461 = vmatpush1.msra.mxu0 0.0
    %1462 = vmatprep.subr.mxu0 0.0
    %1463 = vmatpush1.msra.mxu0 0.0
    %1464 = vmatprep.subr.mxu0 0.0
    %1465 = vmatpush1.msra.mxu0 0.0
    %1466 = vmatprep.subr.mxu0 0.0
    %1467 = vmatpush1.msra.mxu0 0.0
    %1468 = vmatprep.subr.mxu0 0.0
    %1469 = vmatpush1.msra.mxu0 0.0
    %1470 = vmatprep.subr.mxu0 0.0
    %1471 = vmatpush1.msra.mxu0 0.0
    %1472 = vmatprep.subr.mxu0 0.0
    %1473 = vmatpush1.msra.mxu0 0.0
    %1474 = vmatprep.subr.mxu0 0.0
    %1475 = vmatpush1.msra.mxu0 0.0
    %1476 = vmatprep.subr.mxu0 0.0
    %1477 = vmatpush1.msra.mxu0 0.0
    %1478 = vmatprep.subr.mxu0 0.0
    %1479 = vmatpush1.msra.mxu0 0.0
    %1480 = vmatprep.subr.mxu0 0.0
    %1481 = vmatpush1.msra.mxu0 0.0
    %1482 = vmatprep.subr.mxu0 0.0
    %1483 = vmatpush1.msra.mxu0 0.0
    %1484 = vmatprep.subr.mxu0 0.0
    %1485 = vmatpush1.msra.mxu0 0.0
    %1486 = vmatprep.subr.mxu0 0.0
    %1487 = vmatpush1.msra.mxu0 0.0
    %1488 = vmatprep.subr.mxu0 0.0
    %1489 = vmatpush1.msra.mxu0 %v407
    %1490 = vmatprep.subr.mxu0 0.0
    %1491 = vmatpush2.msra.mxu0 0.0
    %1492 = vmatprep.subr.mxu0 0.0
    %1493 = vmatpush2.msra.mxu0 0.0
    %1494 = vmatprep.subr.mxu0 0.0
    %1495 = vmatpush2.msra.mxu0 0.0
    %1496 = vmatprep.subr.mxu0 0.0
    %1497 = vmatpush2.msra.mxu0 0.0
    %1498 = vmatprep.subr.mxu0 0.0
    %1499 = vmatpush2.msra.mxu0 0.0
    %1500 = vmatprep.subr.mxu0 0.0
    %1501 = vmatpush2.msra.mxu0 0.0
    %1502 = vmatprep.subr.mxu0 0.0
    %1503 = vmatpush2.msra.mxu0 0.0
    %1504 = vmatprep.subr.mxu0 0.0
    %1505 = vmatpush2.msra.mxu0 0.0
    %1506 = vmatprep.subr.mxu0 0.0
    %1507 = vmatpush2.msra.mxu0 0.0
    %1508 = vmatprep.subr.mxu0 0.0
    %1509 = vmatpush2.msra.mxu0 0.0
    %1510 = vmatprep.subr.mxu0 0.0
    %1511 = vmatpush2.msra.mxu0 0.0
    %1512 = vmatprep.subr.mxu0 0.0
    %1513 = vmatpush2.msra.mxu0 0.0
    %1514 = vmatprep.subr.mxu0 0.0
    %1515 = vmatpush2.msra.mxu0 0.0
    %1516 = vmatprep.subr.mxu0 0.0
    %1517 = vmatpush2.msra.mxu0 0.0
    %1518 = vmatprep.subr.mxu0 0.0
    %1519 = vmatpush2.msra.mxu0 0.0
    %1520 = vmatprep.subr.mxu0 0.0
    %1521 = vmatpush2.msra.mxu0 0.0
    %1522 = vmatprep.mubr.f32.mxu0 0.0
    %1523 = vmatmul.mubr.f32.gmra.mxu0 %v1456
    %v1524 = vpop.f32.mrf.mxu0
    %v1525 = vadd.f32 0.0, %v1524
    %v1526 = vpop.f32.mrf.mxu0
    %1527 = vdwg.mxu0
    %v1529 = vsel %vm458, %v1152, 0
    %1531 = vmatprep.subr.mxu0 0.0
    %1532 = vmatpush1.msra.mxu0 0.0
    %1533 = vmatprep.subr.mxu0 0.0
    %1534 = vmatpush1.msra.mxu0 0.0
    %1535 = vmatprep.subr.mxu0 0.0
    %1536 = vmatpush1.msra.mxu0 0.0
    %1537 = vmatprep.subr.mxu0 0.0
    %1538 = vmatpush1.msra.mxu0 0.0
    %1539 = vmatprep.subr.mxu0 0.0
    %1540 = vmatpush1.msra.mxu0 0.0
    %1541 = vmatprep.subr.mxu0 0.0
    %1542 = vmatpush1.msra.mxu0 0.0
    %1543 = vmatprep.subr.mxu0 0.0
    %1544 = vmatpush1.msra.mxu0 0.0
    %1545 = vmatprep.subr.mxu0 0.0
    %1546 = vmatpush1.msra.mxu0 0.0
    %1547 = vmatprep.subr.mxu0 0.0
    %1548 = vmatpush1.msra.mxu0 0.0
    %1549 = vmatprep.subr.mxu0 0.0
    %1550 = vmatpush1.msra.mxu0 0.0
    %1551 = vmatprep.subr.mxu0 0.0
    %1552 = vmatpush1.msra.mxu0 0.0
    %1553 = vmatprep.subr.mxu0 0.0
    %1554 = vmatpush1.msra.mxu0 0.0
    %1555 = vmatprep.subr.mxu0 0.0
    %1556 = vmatpush1.msra.mxu0 0.0
    %1557 = vmatprep.subr.mxu0 0.0
    %1558 = vmatpush1.msra.mxu0 0.0
    %1559 = vmatprep.subr.mxu0 0.0
    %1560 = vmatpush1.msra.mxu0 0.0
    %1561 = vmatprep.subr.mxu0 0.0
    %1562 = vmatpush1.msra.mxu0 %v450
    %1563 = vmatprep.subr.mxu0 0.0
    %1564 = vmatpush2.msra.mxu0 0.0
    %1565 = vmatprep.subr.mxu0 0.0
    %1566 = vmatpush2.msra.mxu0 0.0
    %1567 = vmatprep.subr.mxu0 0.0
    %1568 = vmatpush2.msra.mxu0 0.0
    %1569 = vmatprep.subr.mxu0 0.0
    %1570 = vmatpush2.msra.mxu0 0.0
    %1571 = vmatprep.subr.mxu0 0.0
    %1572 = vmatpush2.msra.mxu0 0.0
    %1573 = vmatprep.subr.mxu0 0.0
    %1574 = vmatpush2.msra.mxu0 0.0
    %1575 = vmatprep.subr.mxu0 0.0
    %1576 = vmatpush2.msra.mxu0 0.0
    %1577 = vmatprep.subr.mxu0 0.0
    %1578 = vmatpush2.msra.mxu0 0.0
    %1579 = vmatprep.subr.mxu0 0.0
    %1580 = vmatpush2.msra.mxu0 0.0
    %1581 = vmatprep.subr.mxu0 0.0
    %1582 = vmatpush2.msra.mxu0 0.0
    %1583 = vmatprep.subr.mxu0 0.0
    %1584 = vmatpush2.msra.mxu0 0.0
    %1585 = vmatprep.subr.mxu0 0.0
    %1586 = vmatpush2.msra.mxu0 0.0
    %1587 = vmatprep.subr.mxu0 0.0
    %1588 = vmatpush2.msra.mxu0 0.0
    %1589 = vmatprep.subr.mxu0 0.0
    %1590 = vmatpush2.msra.mxu0 0.0
    %1591 = vmatprep.subr.mxu0 0.0
    %1592 = vmatpush2.msra.mxu0 0.0
    %1593 = vmatprep.subr.mxu0 0.0
    %1594 = vmatpush2.msra.mxu0 0.0
    %1595 = vmatprep.mubr.f32.mxu0 0.0
    %1596 = vmatmul.mubr.f32.gmra.mxu0 %v1529
    %v1597 = vpop.f32.mrf.mxu0
    %v1598 = vadd.f32 0.0, %v1597
    %v1599 = vpop.f32.mrf.mxu0
    %1600 = vdwg.mxu0
    %v1602 = vsel %vm458, %v1153, 0
    %1604 = vmatprep.subr.mxu0 0.0
    %1605 = vmatpush1.msra.mxu0 0.0
    %1606 = vmatprep.subr.mxu0 0.0
    %1607 = vmatpush1.msra.mxu0 0.0
    %1608 = vmatprep.subr.mxu0 0.0
    %1609 = vmatpush1.msra.mxu0 0.0
    %1610 = vmatprep.subr.mxu0 0.0
    %1611 = vmatpush1.msra.mxu0 0.0
    %1612 = vmatprep.subr.mxu0 0.0
    %1613 = vmatpush1.msra.mxu0 0.0
    %1614 = vmatprep.subr.mxu0 0.0
    %1615 = vmatpush1.msra.mxu0 0.0
    %1616 = vmatprep.subr.mxu0 0.0
    %1617 = vmatpush1.msra.mxu0 0.0
    %1618 = vmatprep.subr.mxu0 0.0
    %1619 = vmatpush1.msra.mxu0 0.0
    %1620 = vmatprep.subr.mxu0 0.0
    %1621 = vmatpush1.msra.mxu0 0.0
    %1622 = vmatprep.subr.mxu0 0.0
    %1623 = vmatpush1.msra.mxu0 0.0
    %1624 = vmatprep.subr.mxu0 0.0
    %1625 = vmatpush1.msra.mxu0 0.0
    %1626 = vmatprep.subr.mxu0 0.0
    %1627 = vmatpush1.msra.mxu0 0.0
    %1628 = vmatprep.subr.mxu0 0.0
    %1629 = vmatpush1.msra.mxu0 0.0
    %1630 = vmatprep.subr.mxu0 0.0
    %1631 = vmatpush1.msra.mxu0 0.0
    %1632 = vmatprep.subr.mxu0 0.0
    %1633 = vmatpush1.msra.mxu0 0.0
    %1634 = vmatprep.subr.mxu0 0.0
    %1635 = vmatpush1.msra.mxu0 %v453
    %1636 = vmatprep.subr.mxu0 0.0
    %1637 = vmatpush2.msra.mxu0 0.0
    %1638 = vmatprep.subr.mxu0 0.0
    %1639 = vmatpush2.msra.mxu0 0.0
    %1640 = vmatprep.subr.mxu0 0.0
    %1641 = vmatpush2.msra.mxu0 0.0
    %1642 = vmatprep.subr.mxu0 0.0
    %1643 = vmatpush2.msra.mxu0 0.0
    %1644 = vmatprep.subr.mxu0 0.0
    %1645 = vmatpush2.msra.mxu0 0.0
    %1646 = vmatprep.subr.mxu0 0.0
    %1647 = vmatpush2.msra.mxu0 0.0
    %1648 = vmatprep.subr.mxu0 0.0
    %1649 = vmatpush2.msra.mxu0 0.0
    %1650 = vmatprep.subr.mxu0 0.0
    %1651 = vmatpush2.msra.mxu0 0.0
    %1652 = vmatprep.subr.mxu0 0.0
    %1653 = vmatpush2.msra.mxu0 0.0
    %1654 = vmatprep.subr.mxu0 0.0
    %1655 = vmatpush2.msra.mxu0 0.0
    %1656 = vmatprep.subr.mxu0 0.0
    %1657 = vmatpush2.msra.mxu0 0.0
    %1658 = vmatprep.subr.mxu0 0.0
    %1659 = vmatpush2.msra.mxu0 0.0
    %1660 = vmatprep.subr.mxu0 0.0
    %1661 = vmatpush2.msra.mxu0 0.0
    %1662 = vmatprep.subr.mxu0 0.0
    %1663 = vmatpush2.msra.mxu0 0.0
    %1664 = vmatprep.subr.mxu0 0.0
    %1665 = vmatpush2.msra.mxu0 0.0
    %1666 = vmatprep.subr.mxu0 0.0
    %1667 = vmatpush2.msra.mxu0 0.0
    %1668 = vmatprep.mubr.f32.mxu0 0.0
    %1669 = vmatmul.mubr.f32.gmra.mxu0 %v1602
    %v1670 = vpop.f32.mrf.mxu0
    %v1671 = vadd.f32 0.0, %v1670
    %v1672 = vpop.f32.mrf.mxu0
    %1673 = vdwg.mxu0
    %v1675 = vsel %vm458, %v1154, 0
    %1677 = vmatprep.subr.mxu0 0.0
    %1678 = vmatpush1.msra.mxu0 0.0
    %1679 = vmatprep.subr.mxu0 0.0
    %1680 = vmatpush1.msra.mxu0 0.0
    %1681 = vmatprep.subr.mxu0 0.0
    %1682 = vmatpush1.msra.mxu0 0.0
    %1683 = vmatprep.subr.mxu0 0.0
    %1684 = vmatpush1.msra.mxu0 0.0
    %1685 = vmatprep.subr.mxu0 0.0
    %1686 = vmatpush1.msra.mxu0 0.0
    %1687 = vmatprep.subr.mxu0 0.0
    %1688 = vmatpush1.msra.mxu0 0.0
    %1689 = vmatprep.subr.mxu0 0.0
    %1690 = vmatpush1.msra.mxu0 0.0
    %1691 = vmatprep.subr.mxu0 0.0
    %1692 = vmatpush1.msra.mxu0 0.0
    %1693 = vmatprep.subr.mxu0 0.0
    %1694 = vmatpush1.msra.mxu0 0.0
    %1695 = vmatprep.subr.mxu0 0.0
    %1696 = vmatpush1.msra.mxu0 0.0
    %1697 = vmatprep.subr.mxu0 0.0
    %1698 = vmatpush1.msra.mxu0 0.0
    %1699 = vmatprep.subr.mxu0 0.0
    %1700 = vmatpush1.msra.mxu0 0.0
    %1701 = vmatprep.subr.mxu0 0.0
    %1702 = vmatpush1.msra.mxu0 0.0
    %1703 = vmatprep.subr.mxu0 0.0
    %1704 = vmatpush1.msra.mxu0 0.0
    %1705 = vmatprep.subr.mxu0 0.0
    %1706 = vmatpush1.msra.mxu0 0.0
    %1707 = vmatprep.subr.mxu0 0.0
    %1708 = vmatpush1.msra.mxu0 %v456
    %1709 = vmatprep.subr.mxu0 0.0
    %1710 = vmatpush2.msra.mxu0 0.0
    %1711 = vmatprep.subr.mxu0 0.0
    %1712 = vmatpush2.msra.mxu0 0.0
    %1713 = vmatprep.subr.mxu0 0.0
    %1714 = vmatpush2.msra.mxu0 0.0
    %1715 = vmatprep.subr.mxu0 0.0
    %1716 = vmatpush2.msra.mxu0 0.0
    %1717 = vmatprep.subr.mxu0 0.0
    %1718 = vmatpush2.msra.mxu0 0.0
    %1719 = vmatprep.subr.mxu0 0.0
    %1720 = vmatpush2.msra.mxu0 0.0
    %1721 = vmatprep.subr.mxu0 0.0
    %1722 = vmatpush2.msra.mxu0 0.0
    %1723 = vmatprep.subr.mxu0 0.0
    %1724 = vmatpush2.msra.mxu0 0.0
    %1725 = vmatprep.subr.mxu0 0.0
    %1726 = vmatpush2.msra.mxu0 0.0
    %1727 = vmatprep.subr.mxu0 0.0
    %1728 = vmatpush2.msra.mxu0 0.0
    %1729 = vmatprep.subr.mxu0 0.0
    %1730 = vmatpush2.msra.mxu0 0.0
    %1731 = vmatprep.subr.mxu0 0.0
    %1732 = vmatpush2.msra.mxu0 0.0
    %1733 = vmatprep.subr.mxu0 0.0
    %1734 = vmatpush2.msra.mxu0 0.0
    %1735 = vmatprep.subr.mxu0 0.0
    %1736 = vmatpush2.msra.mxu0 0.0
    %1737 = vmatprep.subr.mxu0 0.0
    %1738 = vmatpush2.msra.mxu0 0.0
    %1739 = vmatprep.subr.mxu0 0.0
    %1740 = vmatpush2.msra.mxu0 0.0
    %1741 = vmatprep.mubr.f32.mxu0 0.0
    %1742 = vmatmul.mubr.f32.gmra.mxu0 %v1675
    %v1743 = vpop.f32.mrf.mxu0
    %v1744 = vadd.f32 0.0, %v1743
    %v1745 = vpop.f32.mrf.mxu0
    %1746 = vdwg.mxu0
    %v1747 = vld [vmem:[#allocation11] sm:$0xff]
    %v1748 = vld [vmem:[#allocation11 + $0x8] sm:$0xff]
    %v1749 = vld [vmem:[#allocation11 + $0x10] sm:$0xff]
    %v1750 = vld [vmem:[#allocation11 + $0x18] sm:$0xff]
    %v1752 = vsel %vm458, %v1233, 0
    %1754 = vmatprep.subr.mxu0 0.0
    %1755 = vmatpush1.msra.mxu0 0.0
    %1756 = vmatprep.subr.mxu0 0.0
    %1757 = vmatpush1.msra.mxu0 0.0
    %1758 = vmatprep.subr.mxu0 0.0
    %1759 = vmatpush1.msra.mxu0 0.0
    %1760 = vmatprep.subr.mxu0 0.0
    %1761 = vmatpush1.msra.mxu0 0.0
    %1762 = vmatprep.subr.mxu0 0.0
    %1763 = vmatpush1.msra.mxu0 0.0
    %1764 = vmatprep.subr.mxu0 0.0
    %1765 = vmatpush1.msra.mxu0 0.0
    %1766 = vmatprep.subr.mxu0 0.0
    %1767 = vmatpush1.msra.mxu0 0.0
    %1768 = vmatprep.subr.mxu0 0.0
    %1769 = vmatpush1.msra.mxu0 0.0
    %1770 = vmatprep.subr.mxu0 0.0
    %1771 = vmatpush1.msra.mxu0 0.0
    %1772 = vmatprep.subr.mxu0 0.0
    %1773 = vmatpush1.msra.mxu0 0.0
    %1774 = vmatprep.subr.mxu0 0.0
    %1775 = vmatpush1.msra.mxu0 0.0
    %1776 = vmatprep.subr.mxu0 0.0
    %1777 = vmatpush1.msra.mxu0 0.0
    %1778 = vmatprep.subr.mxu0 0.0
    %1779 = vmatpush1.msra.mxu0 0.0
    %1780 = vmatprep.subr.mxu0 0.0
    %1781 = vmatpush1.msra.mxu0 0.0
    %1782 = vmatprep.subr.mxu0 0.0
    %1783 = vmatpush1.msra.mxu0 0.0
    %1784 = vmatprep.subr.mxu0 0.0
    %1785 = vmatpush1.msra.mxu0 %v1747
    %1786 = vmatprep.subr.mxu0 0.0
    %1787 = vmatpush2.msra.mxu0 0.0
    %1788 = vmatprep.subr.mxu0 0.0
    %1789 = vmatpush2.msra.mxu0 0.0
    %1790 = vmatprep.subr.mxu0 0.0
    %1791 = vmatpush2.msra.mxu0 0.0
    %1792 = vmatprep.subr.mxu0 0.0
    %1793 = vmatpush2.msra.mxu0 0.0
    %1794 = vmatprep.subr.mxu0 0.0
    %1795 = vmatpush2.msra.mxu0 0.0
    %1796 = vmatprep.subr.mxu0 0.0
    %1797 = vmatpush2.msra.mxu0 0.0
    %1798 = vmatprep.subr.mxu0 0.0
    %1799 = vmatpush2.msra.mxu0 0.0
    %1800 = vmatprep.subr.mxu0 0.0
    %1801 = vmatpush2.msra.mxu0 0.0
    %1802 = vmatprep.subr.mxu0 0.0
    %1803 = vmatpush2.msra.mxu0 0.0
    %1804 = vmatprep.subr.mxu0 0.0
    %1805 = vmatpush2.msra.mxu0 0.0
    %1806 = vmatprep.subr.mxu0 0.0
    %1807 = vmatpush2.msra.mxu0 0.0
    %1808 = vmatprep.subr.mxu0 0.0
    %1809 = vmatpush2.msra.mxu0 0.0
    %1810 = vmatprep.subr.mxu0 0.0
    %1811 = vmatpush2.msra.mxu0 0.0
    %1812 = vmatprep.subr.mxu0 0.0
    %1813 = vmatpush2.msra.mxu0 0.0
    %1814 = vmatprep.subr.mxu0 0.0
    %1815 = vmatpush2.msra.mxu0 0.0
    %1816 = vmatprep.subr.mxu0 0.0
    %1817 = vmatpush2.msra.mxu0 0.0
    %1818 = vmatprep.mubr.f32.mxu0 0.0
    %1819 = vmatmul.mubr.f32.gmra.mxu0 %v1752
    %v1820 = vpop.f32.mrf.mxu0
    %v1821 = vadd.f32 0.0, %v1820
    %v1822 = vpop.f32.mrf.mxu0
    %1823 = vdwg.mxu0
    %v1825 = vsel %vm458, %v1306, 0
    %1827 = vmatprep.subr.mxu0 0.0
    %1828 = vmatpush1.msra.mxu0 0.0
    %1829 = vmatprep.subr.mxu0 0.0
    %1830 = vmatpush1.msra.mxu0 0.0
    %1831 = vmatprep.subr.mxu0 0.0
    %1832 = vmatpush1.msra.mxu0 0.0
    %1833 = vmatprep.subr.mxu0 0.0
    %1834 = vmatpush1.msra.mxu0 0.0
    %1835 = vmatprep.subr.mxu0 0.0
    %1836 = vmatpush1.msra.mxu0 0.0
    %1837 = vmatprep.subr.mxu0 0.0
    %1838 = vmatpush1.msra.mxu0 0.0
    %1839 = vmatprep.subr.mxu0 0.0
    %1840 = vmatpush1.msra.mxu0 0.0
    %1841 = vmatprep.subr.mxu0 0.0
    %1842 = vmatpush1.msra.mxu0 0.0
    %1843 = vmatprep.subr.mxu0 0.0
    %1844 = vmatpush1.msra.mxu0 0.0
    %1845 = vmatprep.subr.mxu0 0.0
    %1846 = vmatpush1.msra.mxu0 0.0
    %1847 = vmatprep.subr.mxu0 0.0
    %1848 = vmatpush1.msra.mxu0 0.0
    %1849 = vmatprep.subr.mxu0 0.0
    %1850 = vmatpush1.msra.mxu0 0.0
    %1851 = vmatprep.subr.mxu0 0.0
    %1852 = vmatpush1.msra.mxu0 0.0
    %1853 = vmatprep.subr.mxu0 0.0
    %1854 = vmatpush1.msra.mxu0 0.0
    %1855 = vmatprep.subr.mxu0 0.0
    %1856 = vmatpush1.msra.mxu0 0.0
    %1857 = vmatprep.subr.mxu0 0.0
    %1858 = vmatpush1.msra.mxu0 %v1748
    %1859 = vmatprep.subr.mxu0 0.0
    %1860 = vmatpush2.msra.mxu0 0.0
    %1861 = vmatprep.subr.mxu0 0.0
    %1862 = vmatpush2.msra.mxu0 0.0
    %1863 = vmatprep.subr.mxu0 0.0
    %1864 = vmatpush2.msra.mxu0 0.0
    %1865 = vmatprep.subr.mxu0 0.0
    %1866 = vmatpush2.msra.mxu0 0.0
    %1867 = vmatprep.subr.mxu0 0.0
    %1868 = vmatpush2.msra.mxu0 0.0
    %1869 = vmatprep.subr.mxu0 0.0
    %1870 = vmatpush2.msra.mxu0 0.0
    %1871 = vmatprep.subr.mxu0 0.0
    %1872 = vmatpush2.msra.mxu0 0.0
    %1873 = vmatprep.subr.mxu0 0.0
    %1874 = vmatpush2.msra.mxu0 0.0
    %1875 = vmatprep.subr.mxu0 0.0
    %1876 = vmatpush2.msra.mxu0 0.0
    %1877 = vmatprep.subr.mxu0 0.0
    %1878 = vmatpush2.msra.mxu0 0.0
    %1879 = vmatprep.subr.mxu0 0.0
    %1880 = vmatpush2.msra.mxu0 0.0
    %1881 = vmatprep.subr.mxu0 0.0
    %1882 = vmatpush2.msra.mxu0 0.0
    %1883 = vmatprep.subr.mxu0 0.0
    %1884 = vmatpush2.msra.mxu0 0.0
    %1885 = vmatprep.subr.mxu0 0.0
    %1886 = vmatpush2.msra.mxu0 0.0
    %1887 = vmatprep.subr.mxu0 0.0
    %1888 = vmatpush2.msra.mxu0 0.0
    %1889 = vmatprep.subr.mxu0 0.0
    %1890 = vmatpush2.msra.mxu0 0.0
    %1891 = vmatprep.mubr.f32.mxu0 0.0
    %1892 = vmatmul.mubr.f32.gmra.mxu0 %v1825
    %v1893 = vpop.f32.mrf.mxu0
    %v1894 = vadd.f32 0.0, %v1893
    %v1895 = vpop.f32.mrf.mxu0
    %1896 = vdwg.mxu0
    %v1898 = vsel %vm458, %v1379, 0
    %1900 = vmatprep.subr.mxu0 0.0
    %1901 = vmatpush1.msra.mxu0 0.0
    %1902 = vmatprep.subr.mxu0 0.0
    %1903 = vmatpush1.msra.mxu0 0.0
    %1904 = vmatprep.subr.mxu0 0.0
    %1905 = vmatpush1.msra.mxu0 0.0
    %1906 = vmatprep.subr.mxu0 0.0
    %1907 = vmatpush1.msra.mxu0 0.0
    %1908 = vmatprep.subr.mxu0 0.0
    %1909 = vmatpush1.msra.mxu0 0.0
    %1910 = vmatprep.subr.mxu0 0.0
    %1911 = vmatpush1.msra.mxu0 0.0
    %1912 = vmatprep.subr.mxu0 0.0
    %1913 = vmatpush1.msra.mxu0 0.0
    %1914 = vmatprep.subr.mxu0 0.0
    %1915 = vmatpush1.msra.mxu0 0.0
    %1916 = vmatprep.subr.mxu0 0.0
    %1917 = vmatpush1.msra.mxu0 0.0
    %1918 = vmatprep.subr.mxu0 0.0
    %1919 = vmatpush1.msra.mxu0 0.0
    %1920 = vmatprep.subr.mxu0 0.0
    %1921 = vmatpush1.msra.mxu0 0.0
    %1922 = vmatprep.subr.mxu0 0.0
    %1923 = vmatpush1.msra.mxu0 0.0
    %1924 = vmatprep.subr.mxu0 0.0
    %1925 = vmatpush1.msra.mxu0 0.0
    %1926 = vmatprep.subr.mxu0 0.0
    %1927 = vmatpush1.msra.mxu0 0.0
    %1928 = vmatprep.subr.mxu0 0.0
    %1929 = vmatpush1.msra.mxu0 0.0
    %1930 = vmatprep.subr.mxu0 0.0
    %1931 = vmatpush1.msra.mxu0 %v1749
    %1932 = vmatprep.subr.mxu0 0.0
    %1933 = vmatpush2.msra.mxu0 0.0
    %1934 = vmatprep.subr.mxu0 0.0
    %1935 = vmatpush2.msra.mxu0 0.0
    %1936 = vmatprep.subr.mxu0 0.0
    %1937 = vmatpush2.msra.mxu0 0.0
    %1938 = vmatprep.subr.mxu0 0.0
    %1939 = vmatpush2.msra.mxu0 0.0
    %1940 = vmatprep.subr.mxu0 0.0
    %1941 = vmatpush2.msra.mxu0 0.0
    %1942 = vmatprep.subr.mxu0 0.0
    %1943 = vmatpush2.msra.mxu0 0.0
    %1944 = vmatprep.subr.mxu0 0.0
    %1945 = vmatpush2.msra.mxu0 0.0
    %1946 = vmatprep.subr.mxu0 0.0
    %1947 = vmatpush2.msra.mxu0 0.0
    %1948 = vmatprep.subr.mxu0 0.0
    %1949 = vmatpush2.msra.mxu0 0.0
    %1950 = vmatprep.subr.mxu0 0.0
    %1951 = vmatpush2.msra.mxu0 0.0
    %1952 = vmatprep.subr.mxu0 0.0
    %1953 = vmatpush2.msra.mxu0 0.0
    %1954 = vmatprep.subr.mxu0 0.0
    %1955 = vmatpush2.msra.mxu0 0.0
    %1956 = vmatprep.subr.mxu0 0.0
    %1957 = vmatpush2.msra.mxu0 0.0
    %1958 = vmatprep.subr.mxu0 0.0
    %1959 = vmatpush2.msra.mxu0 0.0
    %1960 = vmatprep.subr.mxu0 0.0
    %1961 = vmatpush2.msra.mxu0 0.0
    %1962 = vmatprep.subr.mxu0 0.0
    %1963 = vmatpush2.msra.mxu0 0.0
    %1964 = vmatprep.mubr.f32.mxu0 0.0
    %1965 = vmatmul.mubr.f32.gmra.mxu0 %v1898
    %v1966 = vpop.f32.mrf.mxu0
    %v1967 = vadd.f32 0.0, %v1966
    %v1968 = vpop.f32.mrf.mxu0
    %1969 = vdwg.mxu0
    %v1971 = vsel %vm458, %v1452, 0
    %1973 = vmatprep.subr.mxu0 0.0
    %1974 = vmatpush1.msra.mxu0 0.0
    %1975 = vmatprep.subr.mxu0 0.0
    %1976 = vmatpush1.msra.mxu0 0.0
    %1977 = vmatprep.subr.mxu0 0.0
    %1978 = vmatpush1.msra.mxu0 0.0
    %1979 = vmatprep.subr.mxu0 0.0
    %1980 = vmatpush1.msra.mxu0 0.0
    %1981 = vmatprep.subr.mxu0 0.0
    %1982 = vmatpush1.msra.mxu0 0.0
    %1983 = vmatprep.subr.mxu0 0.0
    %1984 = vmatpush1.msra.mxu0 0.0
    %1985 = vmatprep.subr.mxu0 0.0
    %1986 = vmatpush1.msra.mxu0 0.0
    %1987 = vmatprep.subr.mxu0 0.0
    %1988 = vmatpush1.msra.mxu0 0.0
    %1989 = vmatprep.subr.mxu0 0.0
    %1990 = vmatpush1.msra.mxu0 0.0
    %1991 = vmatprep.subr.mxu0 0.0
    %1992 = vmatpush1.msra.mxu0 0.0
    %1993 = vmatprep.subr.mxu0 0.0
    %1994 = vmatpush1.msra.mxu0 0.0
    %1995 = vmatprep.subr.mxu0 0.0
    %1996 = vmatpush1.msra.mxu0 0.0
    %1997 = vmatprep.subr.mxu0 0.0
    %1998 = vmatpush1.msra.mxu0 0.0
    %1999 = vmatprep.subr.mxu0 0.0
    %2000 = vmatpush1.msra.mxu0 0.0
    %2001 = vmatprep.subr.mxu0 0.0
    %2002 = vmatpush1.msra.mxu0 0.0
    %2003 = vmatprep.subr.mxu0 0.0
    %2004 = vmatpush1.msra.mxu0 %v1750
    %2005 = vmatprep.subr.mxu0 0.0
    %2006 = vmatpush2.msra.mxu0 0.0
    %2007 = vmatprep.subr.mxu0 0.0
    %2008 = vmatpush2.msra.mxu0 0.0
    %2009 = vmatprep.subr.mxu0 0.0
    %2010 = vmatpush2.msra.mxu0 0.0
    %2011 = vmatprep.subr.mxu0 0.0
    %2012 = vmatpush2.msra.mxu0 0.0
    %2013 = vmatprep.subr.mxu0 0.0
    %2014 = vmatpush2.msra.mxu0 0.0
    %2015 = vmatprep.subr.mxu0 0.0
    %2016 = vmatpush2.msra.mxu0 0.0
    %2017 = vmatprep.subr.mxu0 0.0
    %2018 = vmatpush2.msra.mxu0 0.0
    %2019 = vmatprep.subr.mxu0 0.0
    %2020 = vmatpush2.msra.mxu0 0.0
    %2021 = vmatprep.subr.mxu0 0.0
    %2022 = vmatpush2.msra.mxu0 0.0
    %2023 = vmatprep.subr.mxu0 0.0
    %2024 = vmatpush2.msra.mxu0 0.0
    %2025 = vmatprep.subr.mxu0 0.0
    %2026 = vmatpush2.msra.mxu0 0.0
    %2027 = vmatprep.subr.mxu0 0.0
    %2028 = vmatpush2.msra.mxu0 0.0
    %2029 = vmatprep.subr.mxu0 0.0
    %2030 = vmatpush2.msra.mxu0 0.0
    %2031 = vmatprep.subr.mxu0 0.0
    %2032 = vmatpush2.msra.mxu0 0.0
    %2033 = vmatprep.subr.mxu0 0.0
    %2034 = vmatpush2.msra.mxu0 0.0
    %2035 = vmatprep.subr.mxu0 0.0
    %2036 = vmatpush2.msra.mxu0 0.0
    %2037 = vmatprep.mubr.f32.mxu0 0.0
    %2038 = vmatmul.mubr.f32.gmra.mxu0 %v1971
    %v2039 = vpop.f32.mrf.mxu0
    %v2040 = vadd.f32 0.0, %v2039
    %v2041 = vpop.f32.mrf.mxu0
    %2042 = vdwg.mxu0
    %v2044 = vsel %vm458, %v1525, 0
    %2046 = vmatprep.subr.mxu0 0.0
    %2047 = vmatpush1.msra.mxu0 0.0
    %2048 = vmatprep.subr.mxu0 0.0
    %2049 = vmatpush1.msra.mxu0 0.0
    %2050 = vmatprep.subr.mxu0 0.0
    %2051 = vmatpush1.msra.mxu0 0.0
    %2052 = vmatprep.subr.mxu0 0.0
    %2053 = vmatpush1.msra.mxu0 0.0
    %2054 = vmatprep.subr.mxu0 0.0
    %2055 = vmatpush1.msra.mxu0 0.0
    %2056 = vmatprep.subr.mxu0 0.0
    %2057 = vmatpush1.msra.mxu0 0.0
    %2058 = vmatprep.subr.mxu0 0.0
    %2059 = vmatpush1.msra.mxu0 0.0
    %2060 = vmatprep.subr.mxu0 0.0
    %2061 = vmatpush1.msra.mxu0 0.0
    %2062 = vmatprep.subr.mxu0 0.0
    %2063 = vmatpush1.msra.mxu0 0.0
    %2064 = vmatprep.subr.mxu0 0.0
    %2065 = vmatpush1.msra.mxu0 0.0
    %2066 = vmatprep.subr.mxu0 0.0
    %2067 = vmatpush1.msra.mxu0 0.0
    %2068 = vmatprep.subr.mxu0 0.0
    %2069 = vmatpush1.msra.mxu0 0.0
    %2070 = vmatprep.subr.mxu0 0.0
    %2071 = vmatpush1.msra.mxu0 0.0
    %2072 = vmatprep.subr.mxu0 0.0
    %2073 = vmatpush1.msra.mxu0 0.0
    %2074 = vmatprep.subr.mxu0 0.0
    %2075 = vmatpush1.msra.mxu0 0.0
    %2076 = vmatprep.subr.mxu0 0.0
    %2077 = vmatpush1.msra.mxu0 %v1747
    %2078 = vmatprep.subr.mxu0 0.0
    %2079 = vmatpush2.msra.mxu0 0.0
    %2080 = vmatprep.subr.mxu0 0.0
    %2081 = vmatpush2.msra.mxu0 0.0
    %2082 = vmatprep.subr.mxu0 0.0
    %2083 = vmatpush2.msra.mxu0 0.0
    %2084 = vmatprep.subr.mxu0 0.0
    %2085 = vmatpush2.msra.mxu0 0.0
    %2086 = vmatprep.subr.mxu0 0.0
    %2087 = vmatpush2.msra.mxu0 0.0
    %2088 = vmatprep.subr.mxu0 0.0
    %2089 = vmatpush2.msra.mxu0 0.0
    %2090 = vmatprep.subr.mxu0 0.0
    %2091 = vmatpush2.msra.mxu0 0.0
    %2092 = vmatprep.subr.mxu0 0.0
    %2093 = vmatpush2.msra.mxu0 0.0
    %2094 = vmatprep.subr.mxu0 0.0
    %2095 = vmatpush2.msra.mxu0 0.0
    %2096 = vmatprep.subr.mxu0 0.0
    %2097 = vmatpush2.msra.mxu0 0.0
    %2098 = vmatprep.subr.mxu0 0.0
    %2099 = vmatpush2.msra.mxu0 0.0
    %2100 = vmatprep.subr.mxu0 0.0
    %2101 = vmatpush2.msra.mxu0 0.0
    %2102 = vmatprep.subr.mxu0 0.0
    %2103 = vmatpush2.msra.mxu0 0.0
    %2104 = vmatprep.subr.mxu0 0.0
    %2105 = vmatpush2.msra.mxu0 0.0
    %2106 = vmatprep.subr.mxu0 0.0
    %2107 = vmatpush2.msra.mxu0 0.0
    %2108 = vmatprep.subr.mxu0 0.0
    %2109 = vmatpush2.msra.mxu0 0.0
    %2110 = vmatprep.mubr.f32.mxu0 0.0
    %2111 = vmatmul.mubr.f32.gmra.mxu0 %v2044
    %v2112 = vpop.f32.mrf.mxu0
    %v2113 = vadd.f32 0.0, %v2112
    %v2114 = vpop.f32.mrf.mxu0
    %2115 = vdwg.mxu0
    %v2117 = vsel %vm458, %v1598, 0
    %2119 = vmatprep.subr.mxu0 0.0
    %2120 = vmatpush1.msra.mxu0 0.0
    %2121 = vmatprep.subr.mxu0 0.0
    %2122 = vmatpush1.msra.mxu0 0.0
    %2123 = vmatprep.subr.mxu0 0.0
    %2124 = vmatpush1.msra.mxu0 0.0
    %2125 = vmatprep.subr.mxu0 0.0
    %2126 = vmatpush1.msra.mxu0 0.0
    %2127 = vmatprep.subr.mxu0 0.0
    %2128 = vmatpush1.msra.mxu0 0.0
    %2129 = vmatprep.subr.mxu0 0.0
    %2130 = vmatpush1.msra.mxu0 0.0
    %2131 = vmatprep.subr.mxu0 0.0
    %2132 = vmatpush1.msra.mxu0 0.0
    %2133 = vmatprep.subr.mxu0 0.0
    %2134 = vmatpush1.msra.mxu0 0.0
    %2135 = vmatprep.subr.mxu0 0.0
    %2136 = vmatpush1.msra.mxu0 0.0
    %2137 = vmatprep.subr.mxu0 0.0
    %2138 = vmatpush1.msra.mxu0 0.0
    %2139 = vmatprep.subr.mxu0 0.0
    %2140 = vmatpush1.msra.mxu0 0.0
    %2141 = vmatprep.subr.mxu0 0.0
    %2142 = vmatpush1.msra.mxu0 0.0
    %2143 = vmatprep.subr.mxu0 0.0
    %2144 = vmatpush1.msra.mxu0 0.0
    %2145 = vmatprep.subr.mxu0 0.0
    %2146 = vmatpush1.msra.mxu0 0.0
    %2147 = vmatprep.subr.mxu0 0.0
    %2148 = vmatpush1.msra.mxu0 0.0
    %2149 = vmatprep.subr.mxu0 0.0
    %2150 = vmatpush1.msra.mxu0 %v1748
    %2151 = vmatprep.subr.mxu0 0.0
    %2152 = vmatpush2.msra.mxu0 0.0
    %2153 = vmatprep.subr.mxu0 0.0
    %2154 = vmatpush2.msra.mxu0 0.0
    %2155 = vmatprep.subr.mxu0 0.0
    %2156 = vmatpush2.msra.mxu0 0.0
    %2157 = vmatprep.subr.mxu0 0.0
    %2158 = vmatpush2.msra.mxu0 0.0
    %2159 = vmatprep.subr.mxu0 0.0
    %2160 = vmatpush2.msra.mxu0 0.0
    %2161 = vmatprep.subr.mxu0 0.0
    %2162 = vmatpush2.msra.mxu0 0.0
    %2163 = vmatprep.subr.mxu0 0.0
    %2164 = vmatpush2.msra.mxu0 0.0
    %2165 = vmatprep.subr.mxu0 0.0
    %2166 = vmatpush2.msra.mxu0 0.0
    %2167 = vmatprep.subr.mxu0 0.0
    %2168 = vmatpush2.msra.mxu0 0.0
    %2169 = vmatprep.subr.mxu0 0.0
    %2170 = vmatpush2.msra.mxu0 0.0
    %2171 = vmatprep.subr.mxu0 0.0
    %2172 = vmatpush2.msra.mxu0 0.0
    %2173 = vmatprep.subr.mxu0 0.0
    %2174 = vmatpush2.msra.mxu0 0.0
    %2175 = vmatprep.subr.mxu0 0.0
    %2176 = vmatpush2.msra.mxu0 0.0
    %2177 = vmatprep.subr.mxu0 0.0
    %2178 = vmatpush2.msra.mxu0 0.0
    %2179 = vmatprep.subr.mxu0 0.0
    %2180 = vmatpush2.msra.mxu0 0.0
    %2181 = vmatprep.subr.mxu0 0.0
    %2182 = vmatpush2.msra.mxu0 0.0
    %2183 = vmatprep.mubr.f32.mxu0 0.0
    %2184 = vmatmul.mubr.f32.gmra.mxu0 %v2117
    %v2185 = vpop.f32.mrf.mxu0
    %v2186 = vadd.f32 0.0, %v2185
    %v2187 = vpop.f32.mrf.mxu0
    %2188 = vdwg.mxu0
    %v2190 = vsel %vm458, %v1671, 0
    %2192 = vmatprep.subr.mxu0 0.0
    %2193 = vmatpush1.msra.mxu0 0.0
    %2194 = vmatprep.subr.mxu0 0.0
    %2195 = vmatpush1.msra.mxu0 0.0
    %2196 = vmatprep.subr.mxu0 0.0
    %2197 = vmatpush1.msra.mxu0 0.0
    %2198 = vmatprep.subr.mxu0 0.0
    %2199 = vmatpush1.msra.mxu0 0.0
    %2200 = vmatprep.subr.mxu0 0.0
    %2201 = vmatpush1.msra.mxu0 0.0
    %2202 = vmatprep.subr.mxu0 0.0
    %2203 = vmatpush1.msra.mxu0 0.0
    %2204 = vmatprep.subr.mxu0 0.0
    %2205 = vmatpush1.msra.mxu0 0.0
    %2206 = vmatprep.subr.mxu0 0.0
    %2207 = vmatpush1.msra.mxu0 0.0
    %2208 = vmatprep.subr.mxu0 0.0
    %2209 = vmatpush1.msra.mxu0 0.0
    %2210 = vmatprep.subr.mxu0 0.0
    %2211 = vmatpush1.msra.mxu0 0.0
    %2212 = vmatprep.subr.mxu0 0.0
    %2213 = vmatpush1.msra.mxu0 0.0
    %2214 = vmatprep.subr.mxu0 0.0
    %2215 = vmatpush1.msra.mxu0 0.0
    %2216 = vmatprep.subr.mxu0 0.0
    %2217 = vmatpush1.msra.mxu0 0.0
    %2218 = vmatprep.subr.mxu0 0.0
    %2219 = vmatpush1.msra.mxu0 0.0
    %2220 = vmatprep.subr.mxu0 0.0
    %2221 = vmatpush1.msra.mxu0 0.0
    %2222 = vmatprep.subr.mxu0 0.0
    %2223 = vmatpush1.msra.mxu0 %v1749
    %2224 = vmatprep.subr.mxu0 0.0
    %2225 = vmatpush2.msra.mxu0 0.0
    %2226 = vmatprep.subr.mxu0 0.0
    %2227 = vmatpush2.msra.mxu0 0.0
    %2228 = vmatprep.subr.mxu0 0.0
    %2229 = vmatpush2.msra.mxu0 0.0
    %2230 = vmatprep.subr.mxu0 0.0
    %2231 = vmatpush2.msra.mxu0 0.0
    %2232 = vmatprep.subr.mxu0 0.0
    %2233 = vmatpush2.msra.mxu0 0.0
    %2234 = vmatprep.subr.mxu0 0.0
    %2235 = vmatpush2.msra.mxu0 0.0
    %2236 = vmatprep.subr.mxu0 0.0
    %2237 = vmatpush2.msra.mxu0 0.0
    %2238 = vmatprep.subr.mxu0 0.0
    %2239 = vmatpush2.msra.mxu0 0.0
    %2240 = vmatprep.subr.mxu0 0.0
    %2241 = vmatpush2.msra.mxu0 0.0
    %2242 = vmatprep.subr.mxu0 0.0
    %2243 = vmatpush2.msra.mxu0 0.0
    %2244 = vmatprep.subr.mxu0 0.0
    %2245 = vmatpush2.msra.mxu0 0.0
    %2246 = vmatprep.subr.mxu0 0.0
    %2247 = vmatpush2.msra.mxu0 0.0
    %2248 = vmatprep.subr.mxu0 0.0
    %2249 = vmatpush2.msra.mxu0 0.0
    %2250 = vmatprep.subr.mxu0 0.0
    %2251 = vmatpush2.msra.mxu0 0.0
    %2252 = vmatprep.subr.mxu0 0.0
    %2253 = vmatpush2.msra.mxu0 0.0
    %2254 = vmatprep.subr.mxu0 0.0
    %2255 = vmatpush2.msra.mxu0 0.0
    %2256 = vmatprep.mubr.f32.mxu0 0.0
    %2257 = vmatmul.mubr.f32.gmra.mxu0 %v2190
    %v2258 = vpop.f32.mrf.mxu0
    %v2259 = vadd.f32 0.0, %v2258
    %v2260 = vpop.f32.mrf.mxu0
    %2261 = vdwg.mxu0
    %v2263 = vsel %vm458, %v1744, 0
    %2265 = vmatprep.subr.mxu0 0.0
    %2266 = vmatpush1.msra.mxu0 0.0
    %2267 = vmatprep.subr.mxu0 0.0
    %2268 = vmatpush1.msra.mxu0 0.0
    %2269 = vmatprep.subr.mxu0 0.0
    %2270 = vmatpush1.msra.mxu0 0.0
    %2271 = vmatprep.subr.mxu0 0.0
    %2272 = vmatpush1.msra.mxu0 0.0
    %2273 = vmatprep.subr.mxu0 0.0
    %2274 = vmatpush1.msra.mxu0 0.0
    %2275 = vmatprep.subr.mxu0 0.0
    %2276 = vmatpush1.msra.mxu0 0.0
    %2277 = vmatprep.subr.mxu0 0.0
    %2278 = vmatpush1.msra.mxu0 0.0
    %2279 = vmatprep.subr.mxu0 0.0
    %2280 = vmatpush1.msra.mxu0 0.0
    %2281 = vmatprep.subr.mxu0 0.0
    %2282 = vmatpush1.msra.mxu0 0.0
    %2283 = vmatprep.subr.mxu0 0.0
    %2284 = vmatpush1.msra.mxu0 0.0
    %2285 = vmatprep.subr.mxu0 0.0
    %2286 = vmatpush1.msra.mxu0 0.0
    %2287 = vmatprep.subr.mxu0 0.0
    %2288 = vmatpush1.msra.mxu0 0.0
    %2289 = vmatprep.subr.mxu0 0.0
    %2290 = vmatpush1.msra.mxu0 0.0
    %2291 = vmatprep.subr.mxu0 0.0
    %2292 = vmatpush1.msra.mxu0 0.0
    %2293 = vmatprep.subr.mxu0 0.0
    %2294 = vmatpush1.msra.mxu0 0.0
    %2295 = vmatprep.subr.mxu0 0.0
    %2296 = vmatpush1.msra.mxu0 %v1750
    %2297 = vmatprep.subr.mxu0 0.0
    %2298 = vmatpush2.msra.mxu0 0.0
    %2299 = vmatprep.subr.mxu0 0.0
    %2300 = vmatpush2.msra.mxu0 0.0
    %2301 = vmatprep.subr.mxu0 0.0
    %2302 = vmatpush2.msra.mxu0 0.0
    %2303 = vmatprep.subr.mxu0 0.0
    %2304 = vmatpush2.msra.mxu0 0.0
    %2305 = vmatprep.subr.mxu0 0.0
    %2306 = vmatpush2.msra.mxu0 0.0
    %2307 = vmatprep.subr.mxu0 0.0
    %2308 = vmatpush2.msra.mxu0 0.0
    %2309 = vmatprep.subr.mxu0 0.0
    %2310 = vmatpush2.msra.mxu0 0.0
    %2311 = vmatprep.subr.mxu0 0.0
    %2312 = vmatpush2.msra.mxu0 0.0
    %2313 = vmatprep.subr.mxu0 0.0
    %2314 = vmatpush2.msra.mxu0 0.0
    %2315 = vmatprep.subr.mxu0 0.0
    %2316 = vmatpush2.msra.mxu0 0.0
    %2317 = vmatprep.subr.mxu0 0.0
    %2318 = vmatpush2.msra.mxu0 0.0
    %2319 = vmatprep.subr.mxu0 0.0
    %2320 = vmatpush2.msra.mxu0 0.0
    %2321 = vmatprep.subr.mxu0 0.0
    %2322 = vmatpush2.msra.mxu0 0.0
    %2323 = vmatprep.subr.mxu0 0.0
    %2324 = vmatpush2.msra.mxu0 0.0
    %2325 = vmatprep.subr.mxu0 0.0
    %2326 = vmatpush2.msra.mxu0 0.0
    %2327 = vmatprep.subr.mxu0 0.0
    %2328 = vmatpush2.msra.mxu0 0.0
    %2329 = vmatprep.mubr.f32.mxu0 0.0
    %2330 = vmatmul.mubr.f32.gmra.mxu0 %v2263
    %v2331 = vpop.f32.mrf.mxu0
    %v2332 = vadd.f32 0.0, %v2331
    %v2333 = vpop.f32.mrf.mxu0
    %2334 = vdwg.mxu0
    %v2335 = vsel %vm132, %v1821, 0.0
    %v2336 = vsel %vm132, %v1894, 0.0
    %v2337 = vadd.f32 %v2335, %v2336
    %v2338 = vsel %vm132, %v1967, 0.0
    %v2339 = vadd.f32 %v2337, %v2338
    %v2340 = vsel %vm132, %v2040, 0.0
    %v2341 = vadd.f32 %v2339, %v2340
    %v2342 = vsel %vm132, %v2113, 0.0
    %v2343 = vsel %vm132, %v2186, 0.0
    %v2344 = vadd.f32 %v2342, %v2343
    %v2345 = vsel %vm132, %v2259, 0.0
    %v2346 = vadd.f32 %v2344, %v2345
    %v2347 = vsel %vm132, %v2332, 0.0
    %v2348 = vadd.f32 %v2346, %v2347
    %v2349 = vld [vmem:[%s7] sm:$0x7]
    %v2350 = vlaneseq
    %v2351 = vshrl.u32 %v2350, 7
    %v2352 = vsub.s32 0, %v2351
    %v2353 = vrot.slane %v2349, %v2352
    %v2354 = vadd.f32 %v2341, %v2353
    %v2355 = vadd.f32 %v2348, %v2353
    %v2356 = vadd.f32 %v2354, %v115
    %v2357 = vadd.f32 %v2355, %v116
    %v2358 = vsel %vm132, %v2356, 0.0
    %2359 = vadd.xlane.f32.xlu0 %v2358
    %v2360 = vpop.xlane.xlu0 %2359
    %v2361 = vsel %vm132, %v2357, 0.0
    %2362 = vadd.xlane.f32.xlu0 %v2361
    %v2363 = vpop.xlane.xlu0 %2362
    %v2364 = vrcp.pop 32.0
    %v2365 = vmul.f32 %v2360, %v2364
    %v2366 = vmul.f32 %v2363, %v2364
    %v2367 = vsub.f32 %v2356, %v2365
    %v2368 = vsub.f32 %v2357, %v2366
    %v2369 = vmul.f32 %v2367, %v2367
    %v2370 = vmul.f32 %v2368, %v2368
    %v2371 = vsel %vm132, %v2369, 0.0
    %2372 = vadd.xlane.f32.xlu0 %v2371
    %v2373 = vpop.xlane.xlu0 %2372
    %v2374 = vsel %vm132, %v2370, 0.0
    %2375 = vadd.xlane.f32.xlu0 %v2374
    %v2376 = vpop.xlane.xlu0 %2375
    %v2377 = vmul.f32 %v2373, %v2364
    %v2378 = vmul.f32 %v2376, %v2364
    %v2379 = vadd.f32 %v2377, 1e-05
    %v2380 = vadd.f32 %v2378, 1e-05
    %v2381 = vrsqrt.pop %v2379
    %v2382 = vrsqrt.pop %v2380
    %v2383 = vmul.f32 %v2367, %v2381
    %v2384 = vmul.f32 %v2368, %v2382
    %v2385 = vlaneseq
    %v2386 = vshrl.u32 %v2385, 7
    %v2387 = vsub.s32 1, %v2386
    %v2388 = vrot.slane %v2349, %v2387
    %v2389 = vmul.f32 %v2383, %v2388
    %v2390 = vmul.f32 %v2384, %v2388
    %v2391 = vlaneseq
    %v2392 = vshrl.u32 %v2391, 7
    %v2393 = vsub.s32 2, %v2392
    %v2394 = vrot.slane %v2349, %v2393
    %v2395 = vadd.f32 %v2389, %v2394
    %v2396 = vadd.f32 %v2390, %v2394
    %2397 = vst.msk [vmem:[#allocation13] sm:$0xff] %vm132, %v2395
    %2398 = vst.msk [vmem:[#allocation13 + $0x8] sm:$0xff] %vm132, %v2396
    // Predicated region
    $region58: #{tpu_custom_call.1} parent=1 // pred_check
      _
    $region59: #{tpu_custom_call.1} parent=1 // pred_check_branch
      %2400 = sbr.rel (0) target = $region61
    $region60: #{tpu_custom_call.1} parent=1 // pred_region
      %s2402 = ssub.s32 256, 256
      %2403 = vsyncadd [#allocation4], %s2402
      %s2404 = sshll.u32 [#allocation13], 4
      %s2405 = int_to_ptr.vmem [resolvable:$true] %s2404
      %2410 = dma.vmem_to_hbm [thread:$0]  %s2405, 256, %s8, [#allocation4], 128, 128, 8
    $region61: #{tpu_custom_call.1} parent=1 // pred_fallthru
      _
    // Predicated region
    $region62: #{tpu_custom_call.1} parent=1 // pred_check
      _
    $region63: #{tpu_custom_call.1} parent=1 // pred_check_branch
      %2412 = sbr.rel (0) target = $region65
    $region64: #{tpu_custom_call.1} parent=1 // pred_region
      %s2414 = ssub.s32 1024, 1024
      %2415 = vsyncadd [#allocation15], %s2414
      %s2416 = sshll.u32 [#allocation14], 4
      %s2417 = int_to_ptr.vmem [resolvable:$true] %s2416
      %2422 = dma.vmem_to_hbm [thread:$0]  %s2417, 1024, %s9, [#allocation15], 128, 128, 8
    $region65: #{tpu_custom_call.1} parent=1 // pred_fallthru
      _
    // Predicated region
    $region66: #{tpu_custom_call.1} parent=1 // pred_check
      _
    $region67: #{tpu_custom_call.1} parent=1 // pred_check_branch
      %2424 = sbr.rel (0) target = $region69
    $region68: #{tpu_custom_call.1} parent=1 // pred_region
      %2425 = dma.done [#allocation4], 256
    $region69: #{tpu_custom_call.1} parent=1 // pred_fallthru
      _
    // Predicated region
    $region70: #{tpu_custom_call.1} parent=1 // pred_check
      _
    $region71: #{tpu_custom_call.1} parent=1 // pred_check_branch
      %2427 = sbr.rel (0) target = $region73
    $region72: #{tpu_custom_call.1} parent=1 // pred_region
      %2428 = dma.done [#allocation15], 1024
    $region73: #{tpu_custom_call.1} parent=1 // pred_fallthru
      _
    %2429 = vsyncpa [#allocation3], 1
    %2430 = vsyncpa [#allocation6], 1
    %2431 = vsyncpa [#allocation9], 1
    %2432 = vsyncpa [#allocation12], 1
    %2433 = vsyncpa [#allocation4], 1
    %2434 = vsyncpa [#allocation15], 1

</llo_original>
